<compile_context>
chip_gen: v7x
topology: tpu7x:2x2x1
jax: 0.10.0
libtpu: 0.0.40
codegen_flags: <defaults>
</compile_context>

<pallas_src>
import numpy as np

import jax
import jax.numpy as jnp
from jax.experimental import pallas as pl
from jax.experimental.pallas import tpu as pltpu


# ----------------------------- constant filter matrices ---------------------
_GAUSS5_TAPS = np.array([1.0, 4.0, 6.0, 4.0, 1.0], np.float64) / 16.0
_BOX3_TAPS = np.array([1.0, 1.0, 1.0], np.float64)


def _band_matrix(n, taps, boundary):
    """(n, n) matrix A with (A @ x)[i] = sum_t taps[t] * x[pad(i + t - r)]."""
    r = len(taps) // 2
    A = np.zeros((n, n), np.float64)
    for t, w in enumerate(taps):
        off = t - r
        for i in range(n):
            j = i + off
            if boundary == "reflect":            # mirror, edge not repeated
                if j < 0:
                    j = -j
                elif j > n - 1:
                    j = 2 * (n - 1) - j
            else:                                # replicate / edge
                j = min(max(j, 0), n - 1)
            A[i, j] += w
    return A


def _pool2_matrix(n):
    """(n//2, n) matrix P with (P @ x)[i] = 0.5 * (x[2i] + x[2i+1])."""
    P = np.zeros((n // 2, n), np.float64)
    for i in range(n // 2):
        P[i, 2 * i] = 0.5
        P[i, 2 * i + 1] = 0.5
    return P


def _filter_matrices(H, W):
    """All banded conv / pool matrices, boundary handling baked in."""
    lap_h = _band_matrix(H, _BOX3_TAPS, "reflect")          # 3-tap box, rows
    lap_w = _band_matrix(W, _BOX3_TAPS, "reflect").T        # 3-tap box, cols
    g_h0 = _band_matrix(H, _GAUSS5_TAPS, "edge")            # 5-tap gauss, rows
    g_w0 = _band_matrix(W, _GAUSS5_TAPS, "edge").T          # 5-tap gauss, cols
    dg_h0 = _pool2_matrix(H) @ g_h0                         # gauss + 2x-pool
    dg_w0 = g_w0 @ _pool2_matrix(W).T
    g_h1 = _band_matrix(H // 2, _GAUSS5_TAPS, "edge")       # level-1 gauss
    g_w1 = _band_matrix(W // 2, _GAUSS5_TAPS, "edge").T
    dg_h1 = _pool2_matrix(H // 2) @ g_h1
    dg_w1 = g_w1 @ _pool2_matrix(W // 2).T
    mats = (lap_h, lap_w, g_h0, g_w0, dg_h0, dg_w0, g_h1, g_w1, dg_h1, dg_w1)
    return tuple(m.astype(np.float32) for m in mats)


# ----------------------------- fused Pallas kernel ---------------------------
_NUM_SUMS = 12
(_S_AD, _S_SQ, _S_PA, _S_P, _S_A, _S_ADM, _S_M, _S_COMP,
 _S_EDGE, _S_BAND0, _S_BAND1, _S_TAIL) = range(_NUM_SUMS)


def _matting_fused_kernel(p_ref, a_ref, img_ref,
                          laph_ref, lapw_ref, gh0_ref, gw0_ref,
                          dgh0_ref, dgw0_ref, gh1_ref, gw1_ref,
                          dgh1_ref, dgw1_ref,
                          sums_ref):
    f32 = jnp.float32

    def mm(x, y):
        return jnp.dot(x, y, preferred_element_type=f32)     # MXU

    def rsum(x):
        # sublane-direction partial reduce first (VALU-friendly), then one
        # final cross-lane reduce.
        return jnp.sum(jnp.sum(x, axis=0, keepdims=True))

    # In-kernel cast keeps HBM traffic at the input dtype.
    p = p_ref[0, 0].astype(f32)          # (H, W)
    a = a_ref[0, 0].astype(f32)          # (H, W)
    img = img_ref[0].astype(f32)         # (3, H, W)

    d = p - a
    ad = jnp.abs(d)
    dsq = d * d                           # shared by MSE + composition
    mask = (a != 0.0).astype(f32)

    s_ad = rsum(ad)                       # sum |p - a|        (l1 / edge mean)
    s_sq = rsum(dsq)                      # sum (p - a)^2      (mse)
    s_pa = rsum(p * a)                    # intersection       (IoU / Dice)
    s_p = rsum(p)
    s_a = rsum(a)
    s_adm = rsum(ad * mask)               # masked L1 numerator
    s_m = rsum(mask)                      # masked L1 denominator

    # composition: sum_c sqrt(img_c^2 * d^2 + eps); sqrt goes to the EUP slot.
    comp = jnp.sqrt(img * img * dsq[None, :, :] + 1e-6)      # (3, H, W)
    s_comp = rsum(comp.sum(axis=0))

    # --- 3x3 Laplacian edge (reflect pad) on d, un-normalized ---------------
    # kornia kernel = box3x3 - 9*center; the /16 norm and *2/255 scale are
    # applied to the scalar in glue.
    box = mm(laph_ref[...], mm(d, lapw_ref[...]))
    s_edge = rsum(jnp.abs(box - 9.0 * d))

    # --- Laplacian pyramid (2 levels) on d -----------------------------------
    # band_k = d_k - G(d_k);  d_{k+1} = avgpool2(G(d_k));  tail = |d_2|.
    gd0 = mm(gh0_ref[...], mm(d, gw0_ref[...]))
    s_band0 = rsum(jnp.abs(d - gd0))
    d1 = mm(dgh0_ref[...], mm(d, dgw0_ref[...]))              # (H/2, W/2)

    gd1 = mm(gh1_ref[...], mm(d1, gw1_ref[...]))
    s_band1 = rsum(jnp.abs(d1 - gd1))
    d2 = mm(dgh1_ref[...], mm(d1, dgw1_ref[...]))             # (H/4, W/4)
    s_tail = rsum(jnp.abs(d2))

    # --- pack the 12 per-batch partial sums into a lane-dense tile ----------
    lane = jax.lax.broadcasted_iota(jnp.int32, (8, 128), 1)
    vec = jnp.zeros((8, 128), f32)
    for idx, s in enumerate((s_ad, s_sq, s_pa, s_p, s_a, s_adm, s_m, s_comp,
                             s_edge, s_band0, s_band1, s_tail)):
        vec = jnp.where(lane == idx, s, vec)
    sums_ref[0] = vec


def _fused_sums(predict, alpha, img):
    """Single fused pass: returns the 12 global scalar sums as a (12,) array."""
    B, _, H, W = predict.shape
    mats = _filter_matrices(H, W)
    mat_specs = [pl.BlockSpec(m.shape, lambda b: (0, 0)) for m in mats]

    raw = pl.pallas_call(
        _matting_fused_kernel,
        out_shape=jax.ShapeDtypeStruct((B, 8, 128), jnp.float32),
        grid=(B,),
        in_specs=[
            pl.BlockSpec((1, 1, H, W), lambda b: (b, 0, 0, 0)),   # predict
            pl.BlockSpec((1, 1, H, W), lambda b: (b, 0, 0, 0)),   # alpha
            pl.BlockSpec((1, 3, H, W), lambda b: (b, 0, 0, 0)),   # img
        ] + mat_specs,
        out_specs=pl.BlockSpec((1, 8, 128), lambda b: (b, 0, 0)),
        compiler_params=pltpu.CompilerParams(
            dimension_semantics=("parallel",),        # megacore over batch
            vmem_limit_bytes=32 * 1024 * 1024),
    )(predict, alpha, img, *(jnp.asarray(m) for m in mats))

    # Per-batch partials -> global sums (tiny B-length reduction as glue).
    return jnp.sum(raw[:, 0, :_NUM_SUMS], axis=0)


# ----------------------------- full forward ----------------------------------
@jax.jit
def matting_loss(predict, alpha, img):
    B, C, H, W = predict.shape            # C == 1
    assert C == 1 and H % 4 == 0 and W % 4 == 0
    # TODO(synk): odd H/W (PyTorch avg_pool2d floors) not handled.

    s = _fused_sums(predict, alpha, img)
    n = float(B * H * W)

    l1 = s[_S_AD] / n
    mse = s[_S_SQ] / n

    smooth = 1.0
    inter = s[_S_PA]
    total = s[_S_P] + s[_S_A]
    union = total - inter
    iou_loss = 1.0 - (inter + smooth) / (union + smooth)
    dice_loss = 1.0 - (2.0 * inter + smooth) / (total + smooth)

    # NOTE: NaN if alpha has no non-zero entry — matches torch.mean(empty).
    mask_l1 = s[_S_ADM] / s[_S_M]
    com_loss = s[_S_COMP] / float(B * 3 * H * W)

    # hoisted constants: /16 kornia norm, *2/255 edge scale, mean over pixels
    l1_sobel = s[_S_EDGE] * (2.0 / (255.0 * 16.0)) / n

    lap_loss = (s[_S_BAND0] / n
                + s[_S_BAND1] / float(B * (H // 2) * (W // 2))
                + s[_S_TAIL] / float(B * (H // 4) * (W // 4)))

    loss_all = (l1 + mse) * 0.5 + (iou_loss + dice_loss) + lap_loss + mask_l1

    # TODO(synk): PyTorch returns host floats via .item(); device scalars are
    # kept here (same values) so the whole forward stays jittable.
    return {
        "l1_loss": l1,
        "mse_loss": mse,
        "l1_sobel_loss": 2.0 * l1_sobel,
        "laplacian_loss": 0.5 * lap_loss,
        "iou_loss": iou_loss,
        "dice_loss": dice_loss,
        "com_loss": com_loss,
        "mask_L1_loss": mask_l1,
        "loss_all": loss_all,
    }


if __name__ == "__main__":
    key = jax.random.PRNGKey(0)
    k1, k2, k3 = jax.random.split(key, 3)
    B, H, W = 2, 32, 32
    predict = jax.random.uniform(k1, (B, 1, H, W), jnp.float32)
    # alpha with a mix of exact zeros and positive values (matting-like)
    alpha = jnp.clip(jax.random.uniform(k2, (B, 1, H, W), jnp.float32) * 1.4 - 0.4,
                     0.0, 1.0)
    img = jax.random.uniform(k3, (B, 3, H, W), jnp.float32)

    out = matting_loss(predict, alpha, img)
    jax.block_until_ready(out)
    print("KERNEL_OK")
</pallas_src>

<mosaic_0001>
module attributes {stable_mosaic.version = 11 : i64} {
  func.func @_matting_fused_kernel(%arg0: i32, %arg1: memref<1x1x32x32xf32, #tpu.memory_space<vmem>>, %arg2: memref<1x1x32x32xf32, #tpu.memory_space<vmem>>, %arg3: memref<1x3x32x32xf32, #tpu.memory_space<vmem>>, %arg4: memref<32x32xf32, #tpu.memory_space<vmem>>, %arg5: memref<32x32xf32, #tpu.memory_space<vmem>>, %arg6: memref<32x32xf32, #tpu.memory_space<vmem>>, %arg7: memref<32x32xf32, #tpu.memory_space<vmem>>, %arg8: memref<16x32xf32, #tpu.memory_space<vmem>>, %arg9: memref<32x16xf32, #tpu.memory_space<vmem>>, %arg10: memref<16x16xf32, #tpu.memory_space<vmem>>, %arg11: memref<16x16xf32, #tpu.memory_space<vmem>>, %arg12: memref<8x16xf32, #tpu.memory_space<vmem>>, %arg13: memref<16x8xf32, #tpu.memory_space<vmem>>, %arg14: memref<1x8x128xf32, #tpu.memory_space<vmem>>) attributes {dimension_semantics = [#tpu.dimension_semantics<parallel>], iteration_bounds = array<i64: 2>, scalar_prefetch = 0 : i64, scratch_operands = 0 : i64, tpu.core_type = #tpu.core_type<tc>, window_params = [{transform_indices = @transform_0, window_bounds = array<i64: 1, 1, 32, 32>}, {transform_indices = @transform_1, window_bounds = array<i64: 1, 1, 32, 32>}, {transform_indices = @transform_2, window_bounds = array<i64: 1, 3, 32, 32>}, {pipeline_mode = #tpu.pipeline_mode<synchronous>, transform_indices = @transform_3, window_bounds = array<i64: 32, 32>}, {pipeline_mode = #tpu.pipeline_mode<synchronous>, transform_indices = @transform_4, window_bounds = array<i64: 32, 32>}, {pipeline_mode = #tpu.pipeline_mode<synchronous>, transform_indices = @transform_5, window_bounds = array<i64: 32, 32>}, {pipeline_mode = #tpu.pipeline_mode<synchronous>, transform_indices = @transform_6, window_bounds = array<i64: 32, 32>}, {pipeline_mode = #tpu.pipeline_mode<synchronous>, transform_indices = @transform_7, window_bounds = array<i64: 16, 32>}, {pipeline_mode = #tpu.pipeline_mode<synchronous>, transform_indices = @transform_8, window_bounds = array<i64: 32, 16>}, {pipeline_mode = #tpu.pipeline_mode<synchronous>, transform_indices = @transform_9, window_bounds = array<i64: 16, 16>}, {pipeline_mode = #tpu.pipeline_mode<synchronous>, transform_indices = @transform_10, window_bounds = array<i64: 16, 16>}, {pipeline_mode = #tpu.pipeline_mode<synchronous>, transform_indices = @transform_11, window_bounds = array<i64: 8, 16>}, {pipeline_mode = #tpu.pipeline_mode<synchronous>, transform_indices = @transform_12, window_bounds = array<i64: 16, 8>}, {transform_indices = @transform_13, window_bounds = array<i64: 1, 8, 128>}]} {
    %c0 = arith.constant 0 : index
    %c0_0 = arith.constant 0 : index
    %c0_1 = arith.constant 0 : index
    %c0_2 = arith.constant 0 : index
    %0 = vector.load %arg1[%c0, %c0_0, %c0_1, %c0_2] : memref<1x1x32x32xf32, #tpu.memory_space<vmem>>, vector<1x1x32x32xf32>
    %1 = vector.shape_cast %0 : vector<1x1x32x32xf32> to vector<32x32xf32>
    %c0_3 = arith.constant 0 : index
    %c0_4 = arith.constant 0 : index
    %c0_5 = arith.constant 0 : index
    %c0_6 = arith.constant 0 : index
    %2 = vector.load %arg2[%c0_3, %c0_4, %c0_5, %c0_6] : memref<1x1x32x32xf32, #tpu.memory_space<vmem>>, vector<1x1x32x32xf32>
    %3 = vector.shape_cast %2 : vector<1x1x32x32xf32> to vector<32x32xf32>
    %c0_7 = arith.constant 0 : index
    %c0_8 = arith.constant 0 : index
    %c0_9 = arith.constant 0 : index
    %c0_10 = arith.constant 0 : index
    %4 = vector.load %arg3[%c0_7, %c0_8, %c0_9, %c0_10] : memref<1x3x32x32xf32, #tpu.memory_space<vmem>>, vector<1x3x32x32xf32>
    %5 = vector.shape_cast %4 : vector<1x3x32x32xf32> to vector<3x32x32xf32>
    %6 = arith.subf %1, %3 : vector<32x32xf32>
    %7 = math.absf %6 : vector<32x32xf32>
    %8 = arith.mulf %6, %6 : vector<32x32xf32>
    %cst = arith.constant 0.000000e+00 : f32
    %9 = vector.broadcast %cst : f32 to vector<32x32xf32>
    %10 = arith.cmpf one, %3, %9 : vector<32x32xf32>
    %11 = arith.extui %10 : vector<32x32xi1> to vector<32x32xi32>
    %12 = arith.sitofp %11 : vector<32x32xi32> to vector<32x32xf32>
    %cst_11 = arith.constant dense<0.000000e+00> : vector<32xf32>
    %13 = vector.multi_reduction <add>, %7, %cst_11 [0] : vector<32x32xf32> to vector<32xf32>
    %14 = vector.shape_cast %13 : vector<32xf32> to vector<1x32xf32>
    %15 = vector.shape_cast %14 : vector<1x32xf32> to vector<1x1x32xf32>
    %cst_12 = arith.constant dense<0.000000e+00> : vector<1xf32>
    %16 = vector.multi_reduction <add>, %15, %cst_12 [1, 2] : vector<1x1x32xf32> to vector<1xf32>
    %17 = vector.shape_cast %16 : vector<1xf32> to vector<1x1x1xf32>
    %18 = vector.extract %17[0, 0, 0] : f32 from vector<1x1x1xf32>
    %cst_13 = arith.constant dense<0.000000e+00> : vector<32xf32>
    %19 = vector.multi_reduction <add>, %8, %cst_13 [0] : vector<32x32xf32> to vector<32xf32>
    %20 = vector.shape_cast %19 : vector<32xf32> to vector<1x32xf32>
    %21 = vector.shape_cast %20 : vector<1x32xf32> to vector<1x1x32xf32>
    %cst_14 = arith.constant dense<0.000000e+00> : vector<1xf32>
    %22 = vector.multi_reduction <add>, %21, %cst_14 [1, 2] : vector<1x1x32xf32> to vector<1xf32>
    %23 = vector.shape_cast %22 : vector<1xf32> to vector<1x1x1xf32>
    %24 = vector.extract %23[0, 0, 0] : f32 from vector<1x1x1xf32>
    %25 = arith.mulf %1, %3 : vector<32x32xf32>
    %cst_15 = arith.constant dense<0.000000e+00> : vector<32xf32>
    %26 = vector.multi_reduction <add>, %25, %cst_15 [0] : vector<32x32xf32> to vector<32xf32>
    %27 = vector.shape_cast %26 : vector<32xf32> to vector<1x32xf32>
    %28 = vector.shape_cast %27 : vector<1x32xf32> to vector<1x1x32xf32>
    %cst_16 = arith.constant dense<0.000000e+00> : vector<1xf32>
    %29 = vector.multi_reduction <add>, %28, %cst_16 [1, 2] : vector<1x1x32xf32> to vector<1xf32>
    %30 = vector.shape_cast %29 : vector<1xf32> to vector<1x1x1xf32>
    %31 = vector.extract %30[0, 0, 0] : f32 from vector<1x1x1xf32>
    %cst_17 = arith.constant dense<0.000000e+00> : vector<32xf32>
    %32 = vector.multi_reduction <add>, %1, %cst_17 [0] : vector<32x32xf32> to vector<32xf32>
    %33 = vector.shape_cast %32 : vector<32xf32> to vector<1x32xf32>
    %34 = vector.shape_cast %33 : vector<1x32xf32> to vector<1x1x32xf32>
    %cst_18 = arith.constant dense<0.000000e+00> : vector<1xf32>
    %35 = vector.multi_reduction <add>, %34, %cst_18 [1, 2] : vector<1x1x32xf32> to vector<1xf32>
    %36 = vector.shape_cast %35 : vector<1xf32> to vector<1x1x1xf32>
    %37 = vector.extract %36[0, 0, 0] : f32 from vector<1x1x1xf32>
    %cst_19 = arith.constant dense<0.000000e+00> : vector<32xf32>
    %38 = vector.multi_reduction <add>, %3, %cst_19 [0] : vector<32x32xf32> to vector<32xf32>
    %39 = vector.shape_cast %38 : vector<32xf32> to vector<1x32xf32>
    %40 = vector.shape_cast %39 : vector<1x32xf32> to vector<1x1x32xf32>
    %cst_20 = arith.constant dense<0.000000e+00> : vector<1xf32>
    %41 = vector.multi_reduction <add>, %40, %cst_20 [1, 2] : vector<1x1x32xf32> to vector<1xf32>
    %42 = vector.shape_cast %41 : vector<1xf32> to vector<1x1x1xf32>
    %43 = vector.extract %42[0, 0, 0] : f32 from vector<1x1x1xf32>
    %44 = arith.mulf %7, %12 : vector<32x32xf32>
    %cst_21 = arith.constant dense<0.000000e+00> : vector<32xf32>
    %45 = vector.multi_reduction <add>, %44, %cst_21 [0] : vector<32x32xf32> to vector<32xf32>
    %46 = vector.shape_cast %45 : vector<32xf32> to vector<1x32xf32>
    %47 = vector.shape_cast %46 : vector<1x32xf32> to vector<1x1x32xf32>
    %cst_22 = arith.constant dense<0.000000e+00> : vector<1xf32>
    %48 = vector.multi_reduction <add>, %47, %cst_22 [1, 2] : vector<1x1x32xf32> to vector<1xf32>
    %49 = vector.shape_cast %48 : vector<1xf32> to vector<1x1x1xf32>
    %50 = vector.extract %49[0, 0, 0] : f32 from vector<1x1x1xf32>
    %cst_23 = arith.constant dense<0.000000e+00> : vector<32xf32>
    %51 = vector.multi_reduction <add>, %12, %cst_23 [0] : vector<32x32xf32> to vector<32xf32>
    %52 = vector.shape_cast %51 : vector<32xf32> to vector<1x32xf32>
    %53 = vector.shape_cast %52 : vector<1x32xf32> to vector<1x1x32xf32>
    %cst_24 = arith.constant dense<0.000000e+00> : vector<1xf32>
    %54 = vector.multi_reduction <add>, %53, %cst_24 [1, 2] : vector<1x1x32xf32> to vector<1xf32>
    %55 = vector.shape_cast %54 : vector<1xf32> to vector<1x1x1xf32>
    %56 = vector.extract %55[0, 0, 0] : f32 from vector<1x1x1xf32>
    %57 = arith.mulf %5, %5 : vector<3x32x32xf32>
    %58 = vector.shape_cast %8 : vector<32x32xf32> to vector<1x32x32xf32>
    %59 = vector.broadcast %58 : vector<1x32x32xf32> to vector<3x32x32xf32>
    %60 = arith.mulf %57, %59 : vector<3x32x32xf32>
    %cst_25 = arith.constant 9.99999997E-7 : f32
    %61 = vector.broadcast %cst_25 : f32 to vector<3x32x32xf32>
    %62 = arith.addf %60, %61 : vector<3x32x32xf32>
    %63 = math.sqrt %62 : vector<3x32x32xf32>
    %cst_26 = arith.constant dense<0.000000e+00> : vector<32x32xf32>
    %64 = vector.multi_reduction <add>, %63, %cst_26 [0] : vector<3x32x32xf32> to vector<32x32xf32>
    %cst_27 = arith.constant dense<0.000000e+00> : vector<32xf32>
    %65 = vector.multi_reduction <add>, %64, %cst_27 [0] : vector<32x32xf32> to vector<32xf32>
    %66 = vector.shape_cast %65 : vector<32xf32> to vector<1x32xf32>
    %67 = vector.shape_cast %66 : vector<1x32xf32> to vector<1x1x32xf32>
    %cst_28 = arith.constant dense<0.000000e+00> : vector<1xf32>
    %68 = vector.multi_reduction <add>, %67, %cst_28 [1, 2] : vector<1x1x32xf32> to vector<1xf32>
    %69 = vector.shape_cast %68 : vector<1xf32> to vector<1x1x1xf32>
    %70 = vector.extract %69[0, 0, 0] : f32 from vector<1x1x1xf32>
    %c0_29 = arith.constant 0 : index
    %c0_30 = arith.constant 0 : index
    %71 = vector.load %arg4[%c0_29, %c0_30] : memref<32x32xf32, #tpu.memory_space<vmem>>, vector<32x32xf32>
    %c0_31 = arith.constant 0 : index
    %c0_32 = arith.constant 0 : index
    %72 = vector.load %arg5[%c0_31, %c0_32] : memref<32x32xf32, #tpu.memory_space<vmem>>, vector<32x32xf32>
    %cst_33 = arith.constant dense<0.000000e+00> : vector<32x32xf32>
    %73 = tpu.matmul %6, %72, %cst_33 {dimension_numbers = #tpu.dot_dimension_numbers<[1], [0], [0], [1], [0, 0, 1, 1], [], []>} : vector<32x32xf32>, vector<32x32xf32>, vector<32x32xf32> -> vector<32x32xf32>
    %cst_34 = arith.constant dense<0.000000e+00> : vector<32x32xf32>
    %74 = tpu.matmul %71, %73, %cst_34 {dimension_numbers = #tpu.dot_dimension_numbers<[1], [0], [0], [1], [0, 0, 1, 1], [], []>} : vector<32x32xf32>, vector<32x32xf32>, vector<32x32xf32> -> vector<32x32xf32>
    %cst_35 = arith.constant 9.000000e+00 : f32
    %75 = vector.broadcast %cst_35 : f32 to vector<32x32xf32>
    %76 = arith.mulf %75, %6 : vector<32x32xf32>
    %77 = arith.subf %74, %76 : vector<32x32xf32>
    %78 = math.absf %77 : vector<32x32xf32>
    %cst_36 = arith.constant dense<0.000000e+00> : vector<32xf32>
    %79 = vector.multi_reduction <add>, %78, %cst_36 [0] : vector<32x32xf32> to vector<32xf32>
    %80 = vector.shape_cast %79 : vector<32xf32> to vector<1x32xf32>
    %81 = vector.shape_cast %80 : vector<1x32xf32> to vector<1x1x32xf32>
    %cst_37 = arith.constant dense<0.000000e+00> : vector<1xf32>
    %82 = vector.multi_reduction <add>, %81, %cst_37 [1, 2] : vector<1x1x32xf32> to vector<1xf32>
    %83 = vector.shape_cast %82 : vector<1xf32> to vector<1x1x1xf32>
    %84 = vector.extract %83[0, 0, 0] : f32 from vector<1x1x1xf32>
    %c0_38 = arith.constant 0 : index
    %c0_39 = arith.constant 0 : index
    %85 = vector.load %arg6[%c0_38, %c0_39] : memref<32x32xf32, #tpu.memory_space<vmem>>, vector<32x32xf32>
    %c0_40 = arith.constant 0 : index
    %c0_41 = arith.constant 0 : index
    %86 = vector.load %arg7[%c0_40, %c0_41] : memref<32x32xf32, #tpu.memory_space<vmem>>, vector<32x32xf32>
    %cst_42 = arith.constant dense<0.000000e+00> : vector<32x32xf32>
    %87 = tpu.matmul %6, %86, %cst_42 {dimension_numbers = #tpu.dot_dimension_numbers<[1], [0], [0], [1], [0, 0, 1, 1], [], []>} : vector<32x32xf32>, vector<32x32xf32>, vector<32x32xf32> -> vector<32x32xf32>
    %cst_43 = arith.constant dense<0.000000e+00> : vector<32x32xf32>
    %88 = tpu.matmul %85, %87, %cst_43 {dimension_numbers = #tpu.dot_dimension_numbers<[1], [0], [0], [1], [0, 0, 1, 1], [], []>} : vector<32x32xf32>, vector<32x32xf32>, vector<32x32xf32> -> vector<32x32xf32>
    %89 = arith.subf %6, %88 : vector<32x32xf32>
    %90 = math.absf %89 : vector<32x32xf32>
    %cst_44 = arith.constant dense<0.000000e+00> : vector<32xf32>
    %91 = vector.multi_reduction <add>, %90, %cst_44 [0] : vector<32x32xf32> to vector<32xf32>
    %92 = vector.shape_cast %91 : vector<32xf32> to vector<1x32xf32>
    %93 = vector.shape_cast %92 : vector<1x32xf32> to vector<1x1x32xf32>
    %cst_45 = arith.constant dense<0.000000e+00> : vector<1xf32>
    %94 = vector.multi_reduction <add>, %93, %cst_45 [1, 2] : vector<1x1x32xf32> to vector<1xf32>
    %95 = vector.shape_cast %94 : vector<1xf32> to vector<1x1x1xf32>
    %96 = vector.extract %95[0, 0, 0] : f32 from vector<1x1x1xf32>
    %c0_46 = arith.constant 0 : index
    %c0_47 = arith.constant 0 : index
    %97 = vector.load %arg8[%c0_46, %c0_47] : memref<16x32xf32, #tpu.memory_space<vmem>>, vector<16x32xf32>
    %c0_48 = arith.constant 0 : index
    %c0_49 = arith.constant 0 : index
    %98 = vector.load %arg9[%c0_48, %c0_49] : memref<32x16xf32, #tpu.memory_space<vmem>>, vector<32x16xf32>
    %cst_50 = arith.constant dense<0.000000e+00> : vector<32x16xf32>
    %99 = tpu.matmul %6, %98, %cst_50 {dimension_numbers = #tpu.dot_dimension_numbers<[1], [0], [0], [1], [0, 0, 1, 1], [], []>} : vector<32x32xf32>, vector<32x16xf32>, vector<32x16xf32> -> vector<32x16xf32>
    %cst_51 = arith.constant dense<0.000000e+00> : vector<16x16xf32>
    %100 = tpu.matmul %97, %99, %cst_51 {dimension_numbers = #tpu.dot_dimension_numbers<[1], [0], [0], [1], [0, 0, 1, 1], [], []>} : vector<16x32xf32>, vector<32x16xf32>, vector<16x16xf32> -> vector<16x16xf32>
    %c0_52 = arith.constant 0 : index
    %c0_53 = arith.constant 0 : index
    %101 = vector.load %arg10[%c0_52, %c0_53] : memref<16x16xf32, #tpu.memory_space<vmem>>, vector<16x16xf32>
    %c0_54 = arith.constant 0 : index
    %c0_55 = arith.constant 0 : index
    %102 = vector.load %arg11[%c0_54, %c0_55] : memref<16x16xf32, #tpu.memory_space<vmem>>, vector<16x16xf32>
    %cst_56 = arith.constant dense<0.000000e+00> : vector<16x16xf32>
    %103 = tpu.matmul %100, %102, %cst_56 {dimension_numbers = #tpu.dot_dimension_numbers<[1], [0], [0], [1], [0, 0, 1, 1], [], []>} : vector<16x16xf32>, vector<16x16xf32>, vector<16x16xf32> -> vector<16x16xf32>
    %cst_57 = arith.constant dense<0.000000e+00> : vector<16x16xf32>
    %104 = tpu.matmul %101, %103, %cst_57 {dimension_numbers = #tpu.dot_dimension_numbers<[1], [0], [0], [1], [0, 0, 1, 1], [], []>} : vector<16x16xf32>, vector<16x16xf32>, vector<16x16xf32> -> vector<16x16xf32>
    %105 = arith.subf %100, %104 : vector<16x16xf32>
    %106 = math.absf %105 : vector<16x16xf32>
    %cst_58 = arith.constant dense<0.000000e+00> : vector<16xf32>
    %107 = vector.multi_reduction <add>, %106, %cst_58 [0] : vector<16x16xf32> to vector<16xf32>
    %108 = vector.shape_cast %107 : vector<16xf32> to vector<1x16xf32>
    %109 = vector.shape_cast %108 : vector<1x16xf32> to vector<1x1x16xf32>
    %cst_59 = arith.constant dense<0.000000e+00> : vector<1xf32>
    %110 = vector.multi_reduction <add>, %109, %cst_59 [1, 2] : vector<1x1x16xf32> to vector<1xf32>
    %111 = vector.shape_cast %110 : vector<1xf32> to vector<1x1x1xf32>
    %112 = vector.extract %111[0, 0, 0] : f32 from vector<1x1x1xf32>
    %c0_60 = arith.constant 0 : index
    %c0_61 = arith.constant 0 : index
    %113 = vector.load %arg12[%c0_60, %c0_61] : memref<8x16xf32, #tpu.memory_space<vmem>>, vector<8x16xf32>
    %c0_62 = arith.constant 0 : index
    %c0_63 = arith.constant 0 : index
    %114 = vector.load %arg13[%c0_62, %c0_63] : memref<16x8xf32, #tpu.memory_space<vmem>>, vector<16x8xf32>
    %cst_64 = arith.constant dense<0.000000e+00> : vector<16x8xf32>
    %115 = tpu.matmul %100, %114, %cst_64 {dimension_numbers = #tpu.dot_dimension_numbers<[1], [0], [0], [1], [0, 0, 1, 1], [], []>} : vector<16x16xf32>, vector<16x8xf32>, vector<16x8xf32> -> vector<16x8xf32>
    %cst_65 = arith.constant dense<0.000000e+00> : vector<8x8xf32>
    %116 = tpu.matmul %113, %115, %cst_65 {dimension_numbers = #tpu.dot_dimension_numbers<[1], [0], [0], [1], [0, 0, 1, 1], [], []>} : vector<8x16xf32>, vector<16x8xf32>, vector<8x8xf32> -> vector<8x8xf32>
    %117 = math.absf %116 : vector<8x8xf32>
    %cst_66 = arith.constant dense<0.000000e+00> : vector<8xf32>
    %118 = vector.multi_reduction <add>, %117, %cst_66 [0] : vector<8x8xf32> to vector<8xf32>
    %119 = vector.shape_cast %118 : vector<8xf32> to vector<1x8xf32>
    %120 = vector.shape_cast %119 : vector<1x8xf32> to vector<1x1x8xf32>
    %cst_67 = arith.constant dense<0.000000e+00> : vector<1xf32>
    %121 = vector.multi_reduction <add>, %120, %cst_67 [1, 2] : vector<1x1x8xf32> to vector<1xf32>
    %122 = vector.shape_cast %121 : vector<1xf32> to vector<1x1x1xf32>
    %123 = vector.extract %122[0, 0, 0] : f32 from vector<1x1x1xf32>
    %124 = tpu.iota {dimensions = array<i32: 1>} : vector<8x128xi32>
    %cst_68 = arith.constant 0.000000e+00 : f32
    %125 = vector.broadcast %cst_68 : f32 to vector<8x128xf32>
    %c0_i32 = arith.constant 0 : i32
    %126 = vector.broadcast %c0_i32 : i32 to vector<8x128xi32>
    %127 = arith.cmpi eq, %124, %126 : vector<8x128xi32>
    %128 = vector.broadcast %18 : f32 to vector<8x128xf32>
    %129 = arith.select %127, %128, %125 : vector<8x128xi1>, vector<8x128xf32>
    %c1_i32 = arith.constant 1 : i32
    %130 = vector.broadcast %c1_i32 : i32 to vector<8x128xi32>
    %131 = arith.cmpi eq, %124, %130 : vector<8x128xi32>
    %132 = vector.broadcast %24 : f32 to vector<8x128xf32>
    %133 = arith.select %131, %132, %129 : vector<8x128xi1>, vector<8x128xf32>
    %c2_i32 = arith.constant 2 : i32
    %134 = vector.broadcast %c2_i32 : i32 to vector<8x128xi32>
    %135 = arith.cmpi eq, %124, %134 : vector<8x128xi32>
    %136 = vector.broadcast %31 : f32 to vector<8x128xf32>
    %137 = arith.select %135, %136, %133 : vector<8x128xi1>, vector<8x128xf32>
    %c3_i32 = arith.constant 3 : i32
    %138 = vector.broadcast %c3_i32 : i32 to vector<8x128xi32>
    %139 = arith.cmpi eq, %124, %138 : vector<8x128xi32>
    %140 = vector.broadcast %37 : f32 to vector<8x128xf32>
    %141 = arith.select %139, %140, %137 : vector<8x128xi1>, vector<8x128xf32>
    %c4_i32 = arith.constant 4 : i32
    %142 = vector.broadcast %c4_i32 : i32 to vector<8x128xi32>
    %143 = arith.cmpi eq, %124, %142 : vector<8x128xi32>
    %144 = vector.broadcast %43 : f32 to vector<8x128xf32>
    %145 = arith.select %143, %144, %141 : vector<8x128xi1>, vector<8x128xf32>
    %c5_i32 = arith.constant 5 : i32
    %146 = vector.broadcast %c5_i32 : i32 to vector<8x128xi32>
    %147 = arith.cmpi eq, %124, %146 : vector<8x128xi32>
    %148 = vector.broadcast %50 : f32 to vector<8x128xf32>
    %149 = arith.select %147, %148, %145 : vector<8x128xi1>, vector<8x128xf32>
    %c6_i32 = arith.constant 6 : i32
    %150 = vector.broadcast %c6_i32 : i32 to vector<8x128xi32>
    %151 = arith.cmpi eq, %124, %150 : vector<8x128xi32>
    %152 = vector.broadcast %56 : f32 to vector<8x128xf32>
    %153 = arith.select %151, %152, %149 : vector<8x128xi1>, vector<8x128xf32>
    %c7_i32 = arith.constant 7 : i32
    %154 = vector.broadcast %c7_i32 : i32 to vector<8x128xi32>
    %155 = arith.cmpi eq, %124, %154 : vector<8x128xi32>
    %156 = vector.broadcast %70 : f32 to vector<8x128xf32>
    %157 = arith.select %155, %156, %153 : vector<8x128xi1>, vector<8x128xf32>
    %c8_i32 = arith.constant 8 : i32
    %158 = vector.broadcast %c8_i32 : i32 to vector<8x128xi32>
    %159 = arith.cmpi eq, %124, %158 : vector<8x128xi32>
    %160 = vector.broadcast %84 : f32 to vector<8x128xf32>
    %161 = arith.select %159, %160, %157 : vector<8x128xi1>, vector<8x128xf32>
    %c9_i32 = arith.constant 9 : i32
    %162 = vector.broadcast %c9_i32 : i32 to vector<8x128xi32>
    %163 = arith.cmpi eq, %124, %162 : vector<8x128xi32>
    %164 = vector.broadcast %96 : f32 to vector<8x128xf32>
    %165 = arith.select %163, %164, %161 : vector<8x128xi1>, vector<8x128xf32>
    %c10_i32 = arith.constant 10 : i32
    %166 = vector.broadcast %c10_i32 : i32 to vector<8x128xi32>
    %167 = arith.cmpi eq, %124, %166 : vector<8x128xi32>
    %168 = vector.broadcast %112 : f32 to vector<8x128xf32>
    %169 = arith.select %167, %168, %165 : vector<8x128xi1>, vector<8x128xf32>
    %c11_i32 = arith.constant 11 : i32
    %170 = vector.broadcast %c11_i32 : i32 to vector<8x128xi32>
    %171 = arith.cmpi eq, %124, %170 : vector<8x128xi32>
    %172 = vector.broadcast %123 : f32 to vector<8x128xf32>
    %173 = arith.select %171, %172, %169 : vector<8x128xi1>, vector<8x128xf32>
    %c0_69 = arith.constant 0 : index
    %c0_70 = arith.constant 0 : index
    %c0_71 = arith.constant 0 : index
    %174 = vector.load %arg14[%c0_69, %c0_70, %c0_71] : memref<1x8x128xf32, #tpu.memory_space<vmem>>, vector<1x8x128xf32>
    %175 = vector.shape_cast %174 : vector<1x8x128xf32> to vector<8x128xf32>
    %176 = vector.shape_cast %173 : vector<8x128xf32> to vector<1x8x128xf32>
    tpu.vector_store %arg14[%c0_69, %c0_70, %c0_71], %176 {strides = array<i32>} : memref<1x8x128xf32, #tpu.memory_space<vmem>>, vector<1x8x128xf32>,
    return
  }
  func.func @transform_0(%arg0: i32) -> (i32, i32, i32, i32) {
    %c0_i32 = arith.constant 0 : i32
    %c0_i32_0 = arith.constant 0 : i32
    %c0_i32_1 = arith.constant 0 : i32
    %c0_i32_2 = arith.constant 0 : i32
    return %arg0, %c0_i32, %c0_i32_0, %c0_i32_1 : i32, i32, i32, i32
  }
  func.func @transform_1(%arg0: i32) -> (i32, i32, i32, i32) {
    %c0_i32 = arith.constant 0 : i32
    %c0_i32_0 = arith.constant 0 : i32
    %c0_i32_1 = arith.constant 0 : i32
    %c0_i32_2 = arith.constant 0 : i32
    return %arg0, %c0_i32, %c0_i32_0, %c0_i32_1 : i32, i32, i32, i32
  }
  func.func @transform_2(%arg0: i32) -> (i32, i32, i32, i32) {
    %c0_i32 = arith.constant 0 : i32
    %c0_i32_0 = arith.constant 0 : i32
    %c0_i32_1 = arith.constant 0 : i32
    %c0_i32_2 = arith.constant 0 : i32
    return %arg0, %c0_i32, %c0_i32_0, %c0_i32_1 : i32, i32, i32, i32
  }
  func.func @transform_3(%arg0: i32) -> (i32, i32) {
    %c0_i32 = arith.constant 0 : i32
    %c0_i32_0 = arith.constant 0 : i32
    %c0_i32_1 = arith.constant 0 : i32
    return %c0_i32, %c0_i32_0 : i32, i32
  }
  func.func @transform_4(%arg0: i32) -> (i32, i32) {
    %c0_i32 = arith.constant 0 : i32
    %c0_i32_0 = arith.constant 0 : i32
    %c0_i32_1 = arith.constant 0 : i32
    return %c0_i32, %c0_i32_0 : i32, i32
  }
  func.func @transform_5(%arg0: i32) -> (i32, i32) {
    %c0_i32 = arith.constant 0 : i32
    %c0_i32_0 = arith.constant 0 : i32
    %c0_i32_1 = arith.constant 0 : i32
    return %c0_i32, %c0_i32_0 : i32, i32
  }
  func.func @transform_6(%arg0: i32) -> (i32, i32) {
    %c0_i32 = arith.constant 0 : i32
    %c0_i32_0 = arith.constant 0 : i32
    %c0_i32_1 = arith.constant 0 : i32
    return %c0_i32, %c0_i32_0 : i32, i32
  }
  func.func @transform_7(%arg0: i32) -> (i32, i32) {
    %c0_i32 = arith.constant 0 : i32
    %c0_i32_0 = arith.constant 0 : i32
    %c0_i32_1 = arith.constant 0 : i32
    return %c0_i32, %c0_i32_0 : i32, i32
  }
  func.func @transform_8(%arg0: i32) -> (i32, i32) {
    %c0_i32 = arith.constant 0 : i32
    %c0_i32_0 = arith.constant 0 : i32
    %c0_i32_1 = arith.constant 0 : i32
    return %c0_i32, %c0_i32_0 : i32, i32
  }
  func.func @transform_9(%arg0: i32) -> (i32, i32) {
    %c0_i32 = arith.constant 0 : i32
    %c0_i32_0 = arith.constant 0 : i32
    %c0_i32_1 = arith.constant 0 : i32
    return %c0_i32, %c0_i32_0 : i32, i32
  }
  func.func @transform_10(%arg0: i32) -> (i32, i32) {
    %c0_i32 = arith.constant 0 : i32
    %c0_i32_0 = arith.constant 0 : i32
    %c0_i32_1 = arith.constant 0 : i32
    return %c0_i32, %c0_i32_0 : i32, i32
  }
  func.func @transform_11(%arg0: i32) -> (i32, i32) {
    %c0_i32 = arith.constant 0 : i32
    %c0_i32_0 = arith.constant 0 : i32
    %c0_i32_1 = arith.constant 0 : i32
    return %c0_i32, %c0_i32_0 : i32, i32
  }
  func.func @transform_12(%arg0: i32) -> (i32, i32) {
    %c0_i32 = arith.constant 0 : i32
    %c0_i32_0 = arith.constant 0 : i32
    %c0_i32_1 = arith.constant 0 : i32
    return %c0_i32, %c0_i32_0 : i32, i32
  }
  func.func @transform_13(%arg0: i32) -> (i32, i32, i32) {
    %c0_i32 = arith.constant 0 : i32
    %c0_i32_0 = arith.constant 0 : i32
    %c0_i32_1 = arith.constant 0 : i32
    return %arg0, %c0_i32, %c0_i32_0 : i32, i32, i32
  }
}

</mosaic_0001>

<llo_original>
// kernel: matting_loss.1
$region0: #{matting_loss.1}
  #allocation0 [shape = 'u32[]', space=smem, size = 0x4, offset = 0x4, fixed_abs, tag = 'smem constant byte address 0x4 - core index']
  #allocation1 [shape = 'u32[144,128]{1,0:T(1,128)}', space=vmem, size = 0x12000, scoped, tag = 'internal scratch']
  %s0 = inlined_call_operand.hbm [shape: f32[2,1,32,32], index: 0, kind: input, shape index: {}]
  %s1 = inlined_call_operand.hbm [shape: f32[2,1,32,32], index: 1, kind: input, shape index: {}]
  %s2 = inlined_call_operand.hbm [shape: f32[2,3,32,32], index: 2, kind: input, shape index: {}]
  %s3 = inlined_call_operand.hbm [shape: f32[32,32], index: 3, kind: input, shape index: {}]
  %s4 = inlined_call_operand.hbm [shape: f32[32,32], index: 4, kind: input, shape index: {}]
  %s5 = inlined_call_operand.hbm [shape: f32[32,32], index: 5, kind: input, shape index: {}]
  %s6 = inlined_call_operand.hbm [shape: f32[32,32], index: 6, kind: input, shape index: {}]
  %s7 = inlined_call_operand.hbm [shape: f32[16,32], index: 7, kind: input, shape index: {}]
  %s8 = inlined_call_operand.vmem [shape: f32[32,16], index: 8, kind: input, shape index: {}]
  %s9 = inlined_call_operand.hbm [shape: f32[16,16], index: 9, kind: input, shape index: {}]
  %s10 = inlined_call_operand.vmem [shape: f32[16,16], index: 10, kind: input, shape index: {}]
  %s11 = inlined_call_operand.hbm [shape: f32[8,16], index: 11, kind: input, shape index: {}]
  %s12 = inlined_call_operand.vmem [shape: f32[16,8], index: 12, kind: input, shape index: {}]
  %s13 = inlined_call_operand.vmem [shape: f32[2,8,128], index: 13, kind: output, shape index: {}]
  %s14 = sld [smem:[#allocation0]]
  $region125: #{matting_loss.1} parent=0
    _
  %s16 = ssub.s32 1, %s14
  %s17 = scalar_select 0, %s16, %s14
  $region1: #{matting_loss.1} parent=0
    #allocation2 [shape = 'u8[32768]{0}', space=vmem, size = 0x8000, scoped, tag = 'input window, operand 0']
    #allocation3 [shape = 's32[2]{0}', space=sflag, size = 0x8, scoped, tag = 'scoped memory for matting_loss.1']
    #allocation4 [shape = 'u8[32768]{0}', space=vmem, size = 0x8000, scoped, tag = 'input window, operand 1']
    #allocation5 [shape = 's32[2]{0}', space=sflag, size = 0x8, scoped, tag = 'scoped memory for matting_loss.1']
    #allocation6 [shape = 'u8[98304]{0}', space=vmem, size = 0x18000, scoped, tag = 'input window, operand 2']
    #allocation7 [shape = 'u8[16384]{0}', space=vmem, size = 0x4000, scoped, tag = 'input window, operand 3, single buffered']
    #allocation8 [shape = 's32[1]{0}', space=sflag, size = 0x4, scoped, tag = 'scoped memory for matting_loss.1']
    #allocation9 [shape = 'u8[16384]{0}', space=vmem, size = 0x4000, scoped, tag = 'input window, operand 4, single buffered']
    #allocation10 [shape = 'u8[16384]{0}', space=vmem, size = 0x4000, scoped, tag = 'input window, operand 5, single buffered']
    #allocation11 [shape = 's32[1]{0}', space=sflag, size = 0x4, scoped, tag = 'scoped memory for matting_loss.1']
    #allocation12 [shape = 'u8[16384]{0}', space=vmem, size = 0x4000, scoped, tag = 'input window, operand 6, single buffered']
    #allocation13 [shape = 'u8[8192]{0}', space=vmem, size = 0x2000, scoped, tag = 'input window, operand 7, single buffered']
    #allocation14 [shape = 's32[1]{0}', space=sflag, size = 0x4, scoped, tag = 'scoped memory for matting_loss.1']
    #allocation15 [shape = 'u8[8192]{0}', space=vmem, size = 0x2000, scoped, tag = 'input window, operand 9, single buffered']
    #allocation16 [shape = 'u8[4096]{0}', space=vmem, size = 0x1000, scoped, tag = 'input window, operand 11, single buffered']
    #allocation17 [shape = 's32[1]{0}', space=sflag, size = 0x4, scoped, tag = 'scoped memory for matting_loss.1']
    %18 = vsyncpa [#allocation3], 0
    %s19 = scalar_lea.sflag [#allocation3], 1
    %20 = vsyncpa %s19, 0
    %21 = vsyncpa [#allocation5], 0
    %s22 = scalar_lea.sflag [#allocation5], 1
    %23 = vsyncpa %s22, 0
    %24 = vsyncpa [#allocation8], 0
    %25 = vsyncpa [#allocation11], 0
    %26 = vsyncpa [#allocation14], 0
    %27 = vsyncpa [#allocation17], 0
    loop: start=0, step=1, limit=4
    $region2: #{matting_loss.1} parent=1 // loop_pre_header
      _
    $region3: #{matting_loss.1} parent=1 // loop_header
      %s29 = sphi 0, %s33
      %p30 = scmp.ge.s32.totalorder %s29, 4
      %s39 = sphi 0, %s41
      %s42 = sphi 0, %s39
      %s43 = sphi 0, %s42
      %s59 = sphi 0, %s43
      %s65 = sphi 0, %s67
      %s68 = sphi 0, %s65
      %s69 = sphi 0, %s68
      %s85 = sphi 0, %s69
      %s91 = sphi 0, %s93
      %s94 = sphi 0, %s91
      %s95 = sphi 0, %s94
      %s111 = sphi 0, %s95
      %s115 = sphi 0, %s115
      %s117 = sphi 0, %s115
      %s118 = sphi 0, %s117
      %s132 = sphi 0, %s118
      %s136 = sphi 0, %s136
      %s138 = sphi 0, %s136
      %s139 = sphi 0, %s138
      %s153 = sphi 0, %s139
      %s157 = sphi 0, %s157
      %s159 = sphi 0, %s157
      %s160 = sphi 0, %s159
      %s174 = sphi 0, %s160
      %s178 = sphi 0, %s178
      %s180 = sphi 0, %s178
      %s181 = sphi 0, %s180
      %s195 = sphi 0, %s181
      %s199 = sphi 0, %s199
      %s201 = sphi 0, %s199
      %s202 = sphi 0, %s201
      %s216 = sphi 0, %s202
      %s220 = sphi 0, %s220
      %s222 = sphi 0, %s220
      %s223 = sphi 0, %s222
      %s237 = sphi 0, %s223
      %s241 = sphi 0, %s241
      %s243 = sphi 0, %s241
      %s244 = sphi 0, %s243
      %s258 = sphi 0, %s244
      %s262 = sphi 0, %s262
      %s264 = sphi 0, %s262
      %s265 = sphi 0, %s264
      %s279 = sphi 0, %s265
      %s283 = sphi 0, %s283
      %s285 = sphi 0, %s283
      %s286 = sphi 0, %s285
      %s300 = sphi 0, %s286
      %s304 = sphi 0, %s304
      %s306 = sphi 0, %s304
      %s307 = sphi 0, %s306
      %s321 = sphi 0, %s307
      %s327 = sphi 0, %s329
      %s330 = sphi 0, %s327
      %s331 = sphi 0, %s330
      %s347 = sphi 0, %s331
    $region4: #{matting_loss.1} parent=1 // loop_header_branch
      %32 = sbr.rel (%p30) target = $region8
    $region5: #{matting_loss.1} parent=1 // loop_body
      %s34 = ssub.s32 %s29, 1
      %s35 = ssub.s32 %s29, 2
      %s36 = sadd.s32 %s29, 1
      %s37 = ssub.s32 %s29, %s36
      %p38 = scmp.eq.s32.totalorder %s37, 0
      %s40 = sadd.s32 %s39, 1
      %s41 = scalar_select %p38, %s39, %s40
      %p44 = pneg %p38
      %p45 = scmp.eq.s32.totalorder %s29, 1
      %p46 = por %p44, %p45
      %p47 = scmp.ne.s32.totalorder %s39, %s42
      %p48 = scmp.eq.s32.totalorder %s29, 0
      %p49 = por %p47, %p48
      %p50 = scmp.ne.s32.totalorder %s39, %s42
      %p51 = scmp.eq.s32.totalorder %s34, 1
      %p52 = por %p50, %p51
      %p53 = scmp.ne.s32.totalorder %s42, %s43
      %p54 = scmp.eq.s32.totalorder %s34, 0
      %p55 = por %p53, %p54
      %p56 = scmp.ne.s32.totalorder %s42, %s43
      %p57 = scmp.eq.s32.totalorder %s35, 1
      %p58 = por %p56, %p57
      %p60 = scmp.ne.s32.totalorder %s43, %s59
      %p61 = scmp.eq.s32.totalorder %s35, 0
      %p62 = por %p60, %p61
      %s63 = ssub.s32 %s29, %s36
      %p64 = scmp.eq.s32.totalorder %s63, 0
      %s66 = sadd.s32 %s65, 1
      %s67 = scalar_select %p64, %s65, %s66
      %p70 = pneg %p64
      %p71 = scmp.eq.s32.totalorder %s29, 1
      %p72 = por %p70, %p71
      %p73 = scmp.ne.s32.totalorder %s65, %s68
      %p74 = scmp.eq.s32.totalorder %s29, 0
      %p75 = por %p73, %p74
      %p76 = scmp.ne.s32.totalorder %s65, %s68
      %p77 = scmp.eq.s32.totalorder %s34, 1
      %p78 = por %p76, %p77
      %p79 = scmp.ne.s32.totalorder %s68, %s69
      %p80 = scmp.eq.s32.totalorder %s34, 0
      %p81 = por %p79, %p80
      %p82 = scmp.ne.s32.totalorder %s68, %s69
      %p83 = scmp.eq.s32.totalorder %s35, 1
      %p84 = por %p82, %p83
      %p86 = scmp.ne.s32.totalorder %s69, %s85
      %p87 = scmp.eq.s32.totalorder %s35, 0
      %p88 = por %p86, %p87
      %s89 = ssub.s32 %s29, %s36
      %p90 = scmp.eq.s32.totalorder %s89, 0
      %s92 = sadd.s32 %s91, 1
      %s93 = scalar_select %p90, %s91, %s92
      %p96 = pneg %p90
      %p97 = scmp.eq.s32.totalorder %s29, 1
      %p98 = por %p96, %p97
      %p99 = scmp.ne.s32.totalorder %s91, %s94
      %p100 = scmp.eq.s32.totalorder %s29, 0
      %p101 = por %p99, %p100
      %p102 = scmp.ne.s32.totalorder %s91, %s94
      %p103 = scmp.eq.s32.totalorder %s34, 1
      %p104 = por %p102, %p103
      %p105 = scmp.ne.s32.totalorder %s94, %s95
      %p106 = scmp.eq.s32.totalorder %s34, 0
      %p107 = por %p105, %p106
      %p108 = scmp.ne.s32.totalorder %s94, %s95
      %p109 = scmp.eq.s32.totalorder %s35, 1
      %p110 = por %p108, %p109
      %p112 = scmp.ne.s32.totalorder %s95, %s111
      %p113 = scmp.eq.s32.totalorder %s35, 0
      %p114 = por %p112, %p113
      %s116 = sadd.s32 %s115, 1
      %p119 = scmp.eq.s32.totalorder %s29, 1
      %p120 = scmp.ne.s32.totalorder %s115, %s117
      %p121 = scmp.eq.s32.totalorder %s29, 0
      %p122 = por %p120, %p121
      %p123 = scmp.ne.s32.totalorder %s115, %s117
      %p124 = scmp.eq.s32.totalorder %s34, 1
      %p125 = por %p123, %p124
      %p126 = scmp.ne.s32.totalorder %s117, %s118
      %p127 = scmp.eq.s32.totalorder %s34, 0
      %p128 = por %p126, %p127
      %p129 = scmp.ne.s32.totalorder %s117, %s118
      %p130 = scmp.eq.s32.totalorder %s35, 1
      %p131 = por %p129, %p130
      %p133 = scmp.ne.s32.totalorder %s118, %s132
      %p134 = scmp.eq.s32.totalorder %s35, 0
      %p135 = por %p133, %p134
      %s137 = sadd.s32 %s136, 1
      %p140 = scmp.eq.s32.totalorder %s29, 1
      %p141 = scmp.ne.s32.totalorder %s136, %s138
      %p142 = scmp.eq.s32.totalorder %s29, 0
      %p143 = por %p141, %p142
      %p144 = scmp.ne.s32.totalorder %s136, %s138
      %p145 = scmp.eq.s32.totalorder %s34, 1
      %p146 = por %p144, %p145
      %p147 = scmp.ne.s32.totalorder %s138, %s139
      %p148 = scmp.eq.s32.totalorder %s34, 0
      %p149 = por %p147, %p148
      %p150 = scmp.ne.s32.totalorder %s138, %s139
      %p151 = scmp.eq.s32.totalorder %s35, 1
      %p152 = por %p150, %p151
      %p154 = scmp.ne.s32.totalorder %s139, %s153
      %p155 = scmp.eq.s32.totalorder %s35, 0
      %p156 = por %p154, %p155
      %s158 = sadd.s32 %s157, 1
      %p161 = scmp.eq.s32.totalorder %s29, 1
      %p162 = scmp.ne.s32.totalorder %s157, %s159
      %p163 = scmp.eq.s32.totalorder %s29, 0
      %p164 = por %p162, %p163
      %p165 = scmp.ne.s32.totalorder %s157, %s159
      %p166 = scmp.eq.s32.totalorder %s34, 1
      %p167 = por %p165, %p166
      %p168 = scmp.ne.s32.totalorder %s159, %s160
      %p169 = scmp.eq.s32.totalorder %s34, 0
      %p170 = por %p168, %p169
      %p171 = scmp.ne.s32.totalorder %s159, %s160
      %p172 = scmp.eq.s32.totalorder %s35, 1
      %p173 = por %p171, %p172
      %p175 = scmp.ne.s32.totalorder %s160, %s174
      %p176 = scmp.eq.s32.totalorder %s35, 0
      %p177 = por %p175, %p176
      %s179 = sadd.s32 %s178, 1
      %p182 = scmp.eq.s32.totalorder %s29, 1
      %p183 = scmp.ne.s32.totalorder %s178, %s180
      %p184 = scmp.eq.s32.totalorder %s29, 0
      %p185 = por %p183, %p184
      %p186 = scmp.ne.s32.totalorder %s178, %s180
      %p187 = scmp.eq.s32.totalorder %s34, 1
      %p188 = por %p186, %p187
      %p189 = scmp.ne.s32.totalorder %s180, %s181
      %p190 = scmp.eq.s32.totalorder %s34, 0
      %p191 = por %p189, %p190
      %p192 = scmp.ne.s32.totalorder %s180, %s181
      %p193 = scmp.eq.s32.totalorder %s35, 1
      %p194 = por %p192, %p193
      %p196 = scmp.ne.s32.totalorder %s181, %s195
      %p197 = scmp.eq.s32.totalorder %s35, 0
      %p198 = por %p196, %p197
      %s200 = sadd.s32 %s199, 1
      %p203 = scmp.eq.s32.totalorder %s29, 1
      %p204 = scmp.ne.s32.totalorder %s199, %s201
      %p205 = scmp.eq.s32.totalorder %s29, 0
      %p206 = por %p204, %p205
      %p207 = scmp.ne.s32.totalorder %s199, %s201
      %p208 = scmp.eq.s32.totalorder %s34, 1
      %p209 = por %p207, %p208
      %p210 = scmp.ne.s32.totalorder %s201, %s202
      %p211 = scmp.eq.s32.totalorder %s34, 0
      %p212 = por %p210, %p211
      %p213 = scmp.ne.s32.totalorder %s201, %s202
      %p214 = scmp.eq.s32.totalorder %s35, 1
      %p215 = por %p213, %p214
      %p217 = scmp.ne.s32.totalorder %s202, %s216
      %p218 = scmp.eq.s32.totalorder %s35, 0
      %p219 = por %p217, %p218
      %s221 = sadd.s32 %s220, 1
      %p224 = scmp.eq.s32.totalorder %s29, 1
      %p225 = scmp.ne.s32.totalorder %s220, %s222
      %p226 = scmp.eq.s32.totalorder %s29, 0
      %p227 = por %p225, %p226
      %p228 = scmp.ne.s32.totalorder %s220, %s222
      %p229 = scmp.eq.s32.totalorder %s34, 1
      %p230 = por %p228, %p229
      %p231 = scmp.ne.s32.totalorder %s222, %s223
      %p232 = scmp.eq.s32.totalorder %s34, 0
      %p233 = por %p231, %p232
      %p234 = scmp.ne.s32.totalorder %s222, %s223
      %p235 = scmp.eq.s32.totalorder %s35, 1
      %p236 = por %p234, %p235
      %p238 = scmp.ne.s32.totalorder %s223, %s237
      %p239 = scmp.eq.s32.totalorder %s35, 0
      %p240 = por %p238, %p239
      %s242 = sadd.s32 %s241, 1
      %p245 = scmp.eq.s32.totalorder %s29, 1
      %p246 = scmp.ne.s32.totalorder %s241, %s243
      %p247 = scmp.eq.s32.totalorder %s29, 0
      %p248 = por %p246, %p247
      %p249 = scmp.ne.s32.totalorder %s241, %s243
      %p250 = scmp.eq.s32.totalorder %s34, 1
      %p251 = por %p249, %p250
      %p252 = scmp.ne.s32.totalorder %s243, %s244
      %p253 = scmp.eq.s32.totalorder %s34, 0
      %p254 = por %p252, %p253
      %p255 = scmp.ne.s32.totalorder %s243, %s244
      %p256 = scmp.eq.s32.totalorder %s35, 1
      %p257 = por %p255, %p256
      %p259 = scmp.ne.s32.totalorder %s244, %s258
      %p260 = scmp.eq.s32.totalorder %s35, 0
      %p261 = por %p259, %p260
      %s263 = sadd.s32 %s262, 1
      %p266 = scmp.eq.s32.totalorder %s29, 1
      %p267 = scmp.ne.s32.totalorder %s262, %s264
      %p268 = scmp.eq.s32.totalorder %s29, 0
      %p269 = por %p267, %p268
      %p270 = scmp.ne.s32.totalorder %s262, %s264
      %p271 = scmp.eq.s32.totalorder %s34, 1
      %p272 = por %p270, %p271
      %p273 = scmp.ne.s32.totalorder %s264, %s265
      %p274 = scmp.eq.s32.totalorder %s34, 0
      %p275 = por %p273, %p274
      %p276 = scmp.ne.s32.totalorder %s264, %s265
      %p277 = scmp.eq.s32.totalorder %s35, 1
      %p278 = por %p276, %p277
      %p280 = scmp.ne.s32.totalorder %s265, %s279
      %p281 = scmp.eq.s32.totalorder %s35, 0
      %p282 = por %p280, %p281
      %s284 = sadd.s32 %s283, 1
      %p287 = scmp.eq.s32.totalorder %s29, 1
      %p288 = scmp.ne.s32.totalorder %s283, %s285
      %p289 = scmp.eq.s32.totalorder %s29, 0
      %p290 = por %p288, %p289
      %p291 = scmp.ne.s32.totalorder %s283, %s285
      %p292 = scmp.eq.s32.totalorder %s34, 1
      %p293 = por %p291, %p292
      %p294 = scmp.ne.s32.totalorder %s285, %s286
      %p295 = scmp.eq.s32.totalorder %s34, 0
      %p296 = por %p294, %p295
      %p297 = scmp.ne.s32.totalorder %s285, %s286
      %p298 = scmp.eq.s32.totalorder %s35, 1
      %p299 = por %p297, %p298
      %p301 = scmp.ne.s32.totalorder %s286, %s300
      %p302 = scmp.eq.s32.totalorder %s35, 0
      %p303 = por %p301, %p302
      %s305 = sadd.s32 %s304, 1
      %p308 = scmp.eq.s32.totalorder %s29, 1
      %p309 = scmp.ne.s32.totalorder %s304, %s306
      %p310 = scmp.eq.s32.totalorder %s29, 0
      %p311 = por %p309, %p310
      %p312 = scmp.ne.s32.totalorder %s304, %s306
      %p313 = scmp.eq.s32.totalorder %s34, 1
      %p314 = por %p312, %p313
      %p315 = scmp.ne.s32.totalorder %s306, %s307
      %p316 = scmp.eq.s32.totalorder %s34, 0
      %p317 = por %p315, %p316
      %p318 = scmp.ne.s32.totalorder %s306, %s307
      %p319 = scmp.eq.s32.totalorder %s35, 1
      %p320 = por %p318, %p319
      %p322 = scmp.ne.s32.totalorder %s307, %s321
      %p323 = scmp.eq.s32.totalorder %s35, 0
      %p324 = por %p322, %p323
      %s325 = ssub.s32 %s29, %s36
      %p326 = scmp.eq.s32.totalorder %s325, 0
      %s328 = sadd.s32 %s327, 1
      %s329 = scalar_select %p326, %s327, %s328
      %p332 = pneg %p326
      %p333 = scmp.eq.s32.totalorder %s29, 1
      %p334 = por %p332, %p333
      %p335 = scmp.ne.s32.totalorder %s327, %s330
      %p336 = scmp.eq.s32.totalorder %s29, 0
      %p337 = por %p335, %p336
      %p338 = scmp.ne.s32.totalorder %s327, %s330
      %p339 = scmp.eq.s32.totalorder %s34, 1
      %p340 = por %p338, %p339
      %p341 = scmp.ne.s32.totalorder %s330, %s331
      %p342 = scmp.eq.s32.totalorder %s34, 0
      %p343 = por %p341, %p342
      %p344 = scmp.ne.s32.totalorder %s330, %s331
      %p345 = scmp.eq.s32.totalorder %s35, 1
      %p346 = por %p344, %p345
      %p348 = scmp.ne.s32.totalorder %s331, %s347
      %p349 = scmp.eq.s32.totalorder %s35, 0
      %p350 = por %p348, %p349
      %p351 = scmp.le.s32.totalorder 1, %s29
      %p352 = scmp.lt.s32.totalorder %s29, 3
      %p353 = pnand %p351, %p352
      %p354 = pneg %p353
      // Predicated region
      $region9: #{matting_loss.1} parent=5 // pred_check
        _
      $region10: #{matting_loss.1} parent=5 // pred_check_branch
        %356 = sbr.rel (%p353) target = $region12
      $region11: #{matting_loss.1} parent=5 // pred_region
        %s357 = ssub.s32 %s29, 1
        // Predicated region
        $region13: #{matting_loss.1} parent=11 // pred_check
          %p358 = pneg %p128
        $region14: #{matting_loss.1} parent=11 // pred_check_branch
          %360 = sbr.rel (%p358) target = $region16
        $region15: #{matting_loss.1} parent=11 // pred_region
          %s362 = ssub.s32 512, 512
          %363 = vsyncadd [#allocation8], %s362
          %s364 = sshll.u32 [#allocation7], 4
          %s365 = int_to_ptr.vmem [resolvable:$true] %s364
          %370 = dma.hbm_to_vmem [thread:$0]  %s3, 512, %s365, [#allocation8], 128, 128, 8
        $region16: #{matting_loss.1} parent=11 // pred_fallthru
          _
        // Predicated region
        $region17: #{matting_loss.1} parent=11 // pred_check
          %p371 = pneg %p149
        $region18: #{matting_loss.1} parent=11 // pred_check_branch
          %373 = sbr.rel (%p371) target = $region20
        $region19: #{matting_loss.1} parent=11 // pred_region
          %s375 = ssub.s32 512, 512
          %376 = vsyncadd [#allocation8], %s375
          %s377 = sshll.u32 [#allocation9], 4
          %s378 = int_to_ptr.vmem [resolvable:$true] %s377
          %383 = dma.hbm_to_vmem [thread:$0]  %s4, 512, %s378, [#allocation8], 128, 128, 8
        $region20: #{matting_loss.1} parent=11 // pred_fallthru
          _
        // Predicated region
        $region21: #{matting_loss.1} parent=11 // pred_check
          %p384 = pneg %p170
        $region22: #{matting_loss.1} parent=11 // pred_check_branch
          %386 = sbr.rel (%p384) target = $region24
        $region23: #{matting_loss.1} parent=11 // pred_region
          %s388 = ssub.s32 512, 512
          %389 = vsyncadd [#allocation11], %s388
          %s390 = sshll.u32 [#allocation10], 4
          %s391 = int_to_ptr.vmem [resolvable:$true] %s390
          %396 = dma.hbm_to_vmem [thread:$0]  %s5, 512, %s391, [#allocation11], 128, 128, 8
        $region24: #{matting_loss.1} parent=11 // pred_fallthru
          _
        // Predicated region
        $region25: #{matting_loss.1} parent=11 // pred_check
          %p397 = pneg %p191
        $region26: #{matting_loss.1} parent=11 // pred_check_branch
          %399 = sbr.rel (%p397) target = $region28
        $region27: #{matting_loss.1} parent=11 // pred_region
          %s401 = ssub.s32 512, 512
          %402 = vsyncadd [#allocation11], %s401
          %s403 = sshll.u32 [#allocation12], 4
          %s404 = int_to_ptr.vmem [resolvable:$true] %s403
          %409 = dma.hbm_to_vmem [thread:$0]  %s6, 512, %s404, [#allocation11], 128, 128, 8
        $region28: #{matting_loss.1} parent=11 // pred_fallthru
          _
        // Predicated region
        $region29: #{matting_loss.1} parent=11 // pred_check
          %p410 = pneg %p212
        $region30: #{matting_loss.1} parent=11 // pred_check_branch
          %412 = sbr.rel (%p410) target = $region32
        $region31: #{matting_loss.1} parent=11 // pred_region
          %s414 = ssub.s32 256, 256
          %415 = vsyncadd [#allocation14], %s414
          %s416 = sshll.u32 [#allocation13], 4
          %s417 = int_to_ptr.vmem [resolvable:$true] %s416
          %422 = dma.hbm_to_vmem [thread:$0]  %s7, 256, %s417, [#allocation14], 128, 128, 8
        $region32: #{matting_loss.1} parent=11 // pred_fallthru
          _
        // Predicated region
        $region33: #{matting_loss.1} parent=11 // pred_check
          %p423 = pneg %p233
        $region34: #{matting_loss.1} parent=11 // pred_check_branch
          %425 = sbr.rel (%p423) target = $region36
        $region35: #{matting_loss.1} parent=11 // pred_region
          _
        $region36: #{matting_loss.1} parent=11 // pred_fallthru
          _
        // Predicated region
        $region37: #{matting_loss.1} parent=11 // pred_check
          %p426 = pneg %p254
        $region38: #{matting_loss.1} parent=11 // pred_check_branch
          %428 = sbr.rel (%p426) target = $region40
        $region39: #{matting_loss.1} parent=11 // pred_region
          %s430 = ssub.s32 256, 256
          %431 = vsyncadd [#allocation14], %s430
          %s432 = sshll.u32 [#allocation15], 4
          %s433 = int_to_ptr.vmem [resolvable:$true] %s432
          %438 = dma.hbm_to_vmem [thread:$0]  %s9, 256, %s433, [#allocation14], 128, 128, 8
        $region40: #{matting_loss.1} parent=11 // pred_fallthru
          _
        // Predicated region
        $region41: #{matting_loss.1} parent=11 // pred_check
          %p439 = pneg %p275
        $region42: #{matting_loss.1} parent=11 // pred_check_branch
          %441 = sbr.rel (%p439) target = $region44
        $region43: #{matting_loss.1} parent=11 // pred_region
          _
        $region44: #{matting_loss.1} parent=11 // pred_fallthru
          _
        // Predicated region
        $region45: #{matting_loss.1} parent=11 // pred_check
          %p442 = pneg %p296
        $region46: #{matting_loss.1} parent=11 // pred_check_branch
          %444 = sbr.rel (%p442) target = $region48
        $region47: #{matting_loss.1} parent=11 // pred_region
          %s446 = ssub.s32 128, 128
          %447 = vsyncadd [#allocation17], %s446
          %s449 = sshll.u32 [#allocation16], 4
          %s450 = int_to_ptr.vmem [resolvable:$true] %s449
          %452 = dma.hbm_to_vmem [thread:$0]  %s11, 128, %s450, [#allocation17]
        $region48: #{matting_loss.1} parent=11 // pred_fallthru
          _
        // Predicated region
        $region49: #{matting_loss.1} parent=11 // pred_check
          %p453 = pneg %p317
        $region50: #{matting_loss.1} parent=11 // pred_check_branch
          %455 = sbr.rel (%p453) target = $region52
        $region51: #{matting_loss.1} parent=11 // pred_region
          _
        $region52: #{matting_loss.1} parent=11 // pred_fallthru
          _
      $region12: #{matting_loss.1} parent=5 // pred_fallthru
        _
      %p456 = scmp.lt.s32.totalorder %s29, 2
      // Predicated region
      $region53: #{matting_loss.1} parent=5 // pred_check
        %p457 = pneg %p456
      $region54: #{matting_loss.1} parent=5 // pred_check_branch
        %459 = sbr.rel (%p457) target = $region56
      $region55: #{matting_loss.1} parent=5 // pred_region
        // Predicated region
        $region57: #{matting_loss.1} parent=55 // pred_check
          %p460 = pneg %p49
        $region58: #{matting_loss.1} parent=55 // pred_check_branch
          %462 = sbr.rel (%p460) target = $region60
        $region59: #{matting_loss.1} parent=55 // pred_region
          %s463 = sand.u32 %s39, 1
          %s464 = scalar_lea.sflag [#allocation3], %s463
          %s465 = sand.u32 %s39, 1
          %s466 = smul.addr %s465, 32
          %s467 = scalar_lea.vmem [#allocation2], %s466
          %s469 = ssub.s32 512, 512
          %470 = vsyncadd %s464, %s469
          %s471 = smul.addr %s29, 4
          %s472 = smul.addr %s471, 128
          %s473 = scalar_lea.hbm %s0, %s472
          %s474 = sshll.u32 %s467, 4
          %s475 = int_to_ptr.vmem [resolvable:$true] %s474
          %480 = dma.hbm_to_vmem [thread:$0]  %s473, 512, %s475, %s464, 128, 128, 8
        $region60: #{matting_loss.1} parent=55 // pred_fallthru
          _
        // Predicated region
        $region61: #{matting_loss.1} parent=55 // pred_check
          %p481 = pneg %p75
        $region62: #{matting_loss.1} parent=55 // pred_check_branch
          %483 = sbr.rel (%p481) target = $region64
        $region63: #{matting_loss.1} parent=55 // pred_region
          %s484 = sand.u32 %s29, 1
          %s485 = scalar_lea.sflag [#allocation5], %s484
          %s486 = sand.u32 %s65, 1
          %s487 = smul.addr %s486, 32
          %s488 = scalar_lea.vmem [#allocation4], %s487
          %s490 = ssub.s32 512, 512
          %491 = vsyncadd %s485, %s490
          %s492 = smul.addr %s29, 4
          %s493 = smul.addr %s492, 128
          %s494 = scalar_lea.hbm %s1, %s493
          %s495 = sshll.u32 %s488, 4
          %s496 = int_to_ptr.vmem [resolvable:$true] %s495
          %501 = dma.hbm_to_vmem [thread:$0]  %s494, 512, %s496, %s485, 128, 128, 8
        $region64: #{matting_loss.1} parent=55 // pred_fallthru
          _
        // Predicated region
        $region65: #{matting_loss.1} parent=55 // pred_check
          %p502 = pneg %p101
        $region66: #{matting_loss.1} parent=55 // pred_check_branch
          %504 = sbr.rel (%p502) target = $region68
        $region67: #{matting_loss.1} parent=55 // pred_region
          %s505 = sand.u32 %s29, 1
          %s506 = scalar_lea.sflag [#allocation5], %s505
          %s507 = sand.u32 %s91, 1
          %s508 = smul.addr %s507, 96
          %s509 = scalar_lea.vmem [#allocation6], %s508
          %s511 = ssub.s32 1536, 1536
          %512 = vsyncadd %s506, %s511
          %s513 = smul.addr %s29, 12
          %s514 = smul.addr %s513, 128
          %s515 = scalar_lea.hbm %s2, %s514
          %s516 = sshll.u32 %s509, 4
          %s517 = int_to_ptr.vmem [resolvable:$true] %s516
          %522 = dma.hbm_to_vmem [thread:$0]  %s515, 1536, %s517, %s506, 128, 128, 8
        $region68: #{matting_loss.1} parent=55 // pred_fallthru
          _
      $region56: #{matting_loss.1} parent=5 // pred_fallthru
        _
      %p523 = scmp.le.s32.totalorder 1, %s29
      %p524 = scmp.lt.s32.totalorder %s29, 3
      %p525 = pnand %p523, %p524
      %p526 = pneg %p525
      // Predicated region
      $region69: #{matting_loss.1} parent=5 // pred_check
        _
      $region70: #{matting_loss.1} parent=5 // pred_check_branch
        %528 = sbr.rel (%p525) target = $region72
      $region71: #{matting_loss.1} parent=5 // pred_region
        %s529 = ssub.s32 %s29, 1
        %s530 = sand.u32 %s42, 1
        %s531 = scalar_lea.sflag [#allocation3], %s530
        %s532 = sand.u32 %s42, 1
        %s533 = smul.addr %s532, 32
        %s534 = scalar_lea.vmem [#allocation2], %s533
        // Predicated region
        $region73: #{matting_loss.1} parent=71 // pred_check
          %p535 = pneg %p55
        $region74: #{matting_loss.1} parent=71 // pred_check_branch
          %537 = sbr.rel (%p535) target = $region76
        $region75: #{matting_loss.1} parent=71 // pred_region
          %538 = dma.done %s531, 512
        $region76: #{matting_loss.1} parent=71 // pred_fallthru
          _
        %s539 = sand.u32 %s34, 1
        %s540 = scalar_lea.sflag [#allocation5], %s539
        %s541 = sand.u32 %s68, 1
        %s542 = smul.addr %s541, 32
        %s543 = scalar_lea.vmem [#allocation4], %s542
        // Predicated region
        $region77: #{matting_loss.1} parent=71 // pred_check
          %p544 = pneg %p81
        $region78: #{matting_loss.1} parent=71 // pred_check_branch
          %546 = sbr.rel (%p544) target = $region80
        $region79: #{matting_loss.1} parent=71 // pred_region
          %547 = dma.done %s540, 512
        $region80: #{matting_loss.1} parent=71 // pred_fallthru
          _
        %s548 = sand.u32 %s34, 1
        %s549 = scalar_lea.sflag [#allocation5], %s548
        %s550 = sand.u32 %s94, 1
        %s551 = smul.addr %s550, 96
        %s552 = scalar_lea.vmem [#allocation6], %s551
        // Predicated region
        $region81: #{matting_loss.1} parent=71 // pred_check
          %p553 = pneg %p107
        $region82: #{matting_loss.1} parent=71 // pred_check_branch
          %555 = sbr.rel (%p553) target = $region84
        $region83: #{matting_loss.1} parent=71 // pred_region
          %556 = dma.done %s549, 1536
        $region84: #{matting_loss.1} parent=71 // pred_fallthru
          _
        // Predicated region
        $region85: #{matting_loss.1} parent=71 // pred_check
          %p557 = pneg %p128
        $region86: #{matting_loss.1} parent=71 // pred_check_branch
          %559 = sbr.rel (%p557) target = $region88
        $region87: #{matting_loss.1} parent=71 // pred_region
          %560 = dma.done [#allocation8], 512
        $region88: #{matting_loss.1} parent=71 // pred_fallthru
          _
        // Predicated region
        $region89: #{matting_loss.1} parent=71 // pred_check
          %p561 = pneg %p149
        $region90: #{matting_loss.1} parent=71 // pred_check_branch
          %563 = sbr.rel (%p561) target = $region92
        $region91: #{matting_loss.1} parent=71 // pred_region
          %564 = dma.done [#allocation8], 512
        $region92: #{matting_loss.1} parent=71 // pred_fallthru
          _
        // Predicated region
        $region93: #{matting_loss.1} parent=71 // pred_check
          %p565 = pneg %p170
        $region94: #{matting_loss.1} parent=71 // pred_check_branch
          %567 = sbr.rel (%p565) target = $region96
        $region95: #{matting_loss.1} parent=71 // pred_region
          %568 = dma.done [#allocation11], 512
        $region96: #{matting_loss.1} parent=71 // pred_fallthru
          _
        // Predicated region
        $region97: #{matting_loss.1} parent=71 // pred_check
          %p569 = pneg %p191
        $region98: #{matting_loss.1} parent=71 // pred_check_branch
          %571 = sbr.rel (%p569) target = $region100
        $region99: #{matting_loss.1} parent=71 // pred_region
          %572 = dma.done [#allocation11], 512
        $region100: #{matting_loss.1} parent=71 // pred_fallthru
          _
        // Predicated region
        $region101: #{matting_loss.1} parent=71 // pred_check
          %p573 = pneg %p212
        $region102: #{matting_loss.1} parent=71 // pred_check_branch
          %575 = sbr.rel (%p573) target = $region104
        $region103: #{matting_loss.1} parent=71 // pred_region
          %576 = dma.done [#allocation14], 256
        $region104: #{matting_loss.1} parent=71 // pred_fallthru
          _
        // Predicated region
        $region105: #{matting_loss.1} parent=71 // pred_check
          %p577 = pneg %p254
        $region106: #{matting_loss.1} parent=71 // pred_check_branch
          %579 = sbr.rel (%p577) target = $region108
        $region107: #{matting_loss.1} parent=71 // pred_region
          %580 = dma.done [#allocation14], 256
        $region108: #{matting_loss.1} parent=71 // pred_fallthru
          _
        // Predicated region
        $region109: #{matting_loss.1} parent=71 // pred_check
          %p581 = pneg %p296
        $region110: #{matting_loss.1} parent=71 // pred_check_branch
          %583 = sbr.rel (%p581) target = $region112
        $region111: #{matting_loss.1} parent=71 // pred_region
          %584 = dma.done [#allocation17], 128
        $region112: #{matting_loss.1} parent=71 // pred_fallthru
          _
        %s585 = sand.u32 %s42, 1
        %s586 = scalar_lea.sflag [#allocation3], %s585
        %s587 = sand.u32 %s42, 1
        %s588 = smul.addr %s587, 32
        %s589 = scalar_lea.vmem [#allocation2], %s588
        %p590 = pneg %p55
        %p591 = pneg %p52
        %s592 = sand.u32 %s34, 1
        %s593 = scalar_lea.sflag [#allocation5], %s592
        %s594 = sand.u32 %s68, 1
        %s595 = smul.addr %s594, 32
        %s596 = scalar_lea.vmem [#allocation4], %s595
        %p597 = pneg %p81
        %p598 = pneg %p78
        %s599 = sand.u32 %s34, 1
        %s600 = scalar_lea.sflag [#allocation5], %s599
        %s601 = sand.u32 %s94, 1
        %s602 = smul.addr %s601, 96
        %s603 = scalar_lea.vmem [#allocation6], %s602
        %p604 = pneg %p107
        %p605 = pneg %p104
        %p606 = pneg %p128
        %p607 = pneg %p125
        %p608 = pneg %p149
        %p609 = pneg %p146
        %p610 = pneg %p170
        %p611 = pneg %p167
        %p612 = pneg %p191
        %p613 = pneg %p188
        %p614 = pneg %p212
        %p615 = pneg %p209
        %p616 = pneg %p233
        %p617 = pneg %p230
        %p618 = pneg %p254
        %p619 = pneg %p251
        %p620 = pneg %p275
        %p621 = pneg %p272
        %p622 = pneg %p296
        %p623 = pneg %p293
        %p624 = pneg %p317
        %p625 = pneg %p314
        %p626 = pneg %p343
        %p627 = pneg %p340
        %p628 = scmp.lt.s32.totalorder %s34, 1
        %s629 = scalar_select %p628, %s34, 1
        %s630 = smul.addr %s629, 8
        %s631 = scalar_lea.vmem %s13, %s630
        %p632 = scmp.lt.s32.totalorder %s34, 1
        %s633 = scalar_select %p632, %s34, 1
        %s634 = smul.addr %s633, 8
        %s635 = scalar_lea.vmem %s13, %s634
        %v636 = vld [vmem:[%s534] sm:$0xff]
        %v637 = vld [vmem:[%s534 + $0x8] sm:$0xff]
        %v638 = vld [vmem:[%s534 + $0x10] sm:$0xff]
        %v639 = vld [vmem:[%s534 + $0x18] sm:$0xff]
        %v640 = vld [vmem:[%s543] sm:$0xff]
        %v641 = vld [vmem:[%s543 + $0x8] sm:$0xff]
        %v642 = vld [vmem:[%s543 + $0x10] sm:$0xff]
        %v643 = vld [vmem:[%s543 + $0x18] sm:$0xff]
        %v644 = vld [vmem:[%s552] sm:$0xff]
        %v645 = vld [vmem:[%s552 + $0x8] sm:$0xff]
        %v646 = vld [vmem:[%s552 + $0x10] sm:$0xff]
        %v647 = vld [vmem:[%s552 + $0x18] sm:$0xff]
        %v648 = vld [vmem:[%s552 + $0x20] sm:$0xff]
        %v649 = vld [vmem:[%s552 + $0x28] sm:$0xff]
        %v650 = vld [vmem:[%s552 + $0x30] sm:$0xff]
        %v651 = vld [vmem:[%s552 + $0x38] sm:$0xff]
        %v652 = vld [vmem:[%s552 + $0x40] sm:$0xff]
        %v653 = vld [vmem:[%s552 + $0x48] sm:$0xff]
        %v654 = vld [vmem:[%s552 + $0x50] sm:$0xff]
        %v655 = vld [vmem:[%s552 + $0x58] sm:$0xff]
        %v656 = vsub.f32 %v636, %v640
        %v657 = vsub.f32 %v637, %v641
        %v658 = vsub.f32 %v638, %v642
        %v659 = vsub.f32 %v639, %v643
        %v660 = vand.u32 2147483647, %v656
        %v661 = vand.u32 2147483647, %v657
        %v662 = vand.u32 2147483647, %v658
        %v663 = vand.u32 2147483647, %v659
        %v664 = vmul.f32 %v656, %v656
        %v665 = vmul.f32 %v657, %v657
        %v666 = vmul.f32 %v658, %v658
        %v667 = vmul.f32 %v659, %v659
        %vm668 = vcmp.ne.f32.partialorder %v640, 0.0
        %vm669 = vcmp.ne.f32.partialorder %v641, 0.0
        %vm670 = vcmp.ne.f32.partialorder %v642, 0.0
        %vm671 = vcmp.ne.f32.partialorder %v643, 0.0
        %v672 = vsel %vm668, 1, 0
        %v673 = vsel %vm669, 1, 0
        %v674 = vsel %vm670, 1, 0
        %v675 = vsel %vm671, 1, 0
        %v676 = vcvt.s32.f32 %v672
        %v677 = vcvt.s32.f32 %v673
        %v678 = vcvt.s32.f32 %v674
        %v679 = vcvt.s32.f32 %v675
        %vm680 = vcmask 261120
        %v681 = vsel %vm680, %v660, 0.0
        %v682 = vsel %vm680, %v661, 0.0
        %v683 = vadd.f32 %v681, %v682
        %v684 = vsel %vm680, %v662, 0.0
        %v685 = vadd.f32 %v683, %v684
        %v686 = vsel %vm680, %v663, 0.0
        %v687 = vadd.f32 %v685, %v686
        %v688 = vrot.slane %v687, 4
        %v689 = vadd.f32 %v687, %v688
        %v690 = vrot.slane %v689, 2
        %v691 = vadd.f32 %v689, %v690
        %v692 = vrot.slane %v691, 1
        %v693 = vadd.f32 %v691, %v692
        %vm694 = vcmask 253952
        %v695 = vsel %vm694, %v693, 0.0
        %696 = vadd.xlane.f32.xlu0 %v695
        %v697 = vpop.xlane.xlu0 %696
        %v698 = vrot.slane %v697, 4
        %v699 = vadd.f32 %v697, %v698
        %v700 = vrot.slane %v699, 2
        %v701 = vadd.f32 %v699, %v700
        %v702 = vrot.slane %v701, 1
        %v703 = vadd.f32 %v701, %v702
        %s704 = vtos %v703
        %v705 = vsel %vm680, %v664, 0.0
        %v706 = vsel %vm680, %v665, 0.0
        %v707 = vadd.f32 %v705, %v706
        %v708 = vsel %vm680, %v666, 0.0
        %v709 = vadd.f32 %v707, %v708
        %v710 = vsel %vm680, %v667, 0.0
        %v711 = vadd.f32 %v709, %v710
        %v712 = vrot.slane %v711, 4
        %v713 = vadd.f32 %v711, %v712
        %v714 = vrot.slane %v713, 2
        %v715 = vadd.f32 %v713, %v714
        %v716 = vrot.slane %v715, 1
        %v717 = vadd.f32 %v715, %v716
        %v718 = vsel %vm694, %v717, 0.0
        %719 = vadd.xlane.f32.xlu0 %v718
        %v720 = vpop.xlane.xlu0 %719
        %v721 = vrot.slane %v720, 4
        %v722 = vadd.f32 %v720, %v721
        %v723 = vrot.slane %v722, 2
        %v724 = vadd.f32 %v722, %v723
        %v725 = vrot.slane %v724, 1
        %v726 = vadd.f32 %v724, %v725
        %s727 = vtos %v726
        %v728 = vmul.f32 %v636, %v640
        %v729 = vmul.f32 %v637, %v641
        %v730 = vmul.f32 %v638, %v642
        %v731 = vmul.f32 %v639, %v643
        %v732 = vsel %vm680, %v728, 0.0
        %v733 = vsel %vm680, %v729, 0.0
        %v734 = vadd.f32 %v732, %v733
        %v735 = vsel %vm680, %v730, 0.0
        %v736 = vadd.f32 %v734, %v735
        %v737 = vsel %vm680, %v731, 0.0
        %v738 = vadd.f32 %v736, %v737
        %v739 = vrot.slane %v738, 4
        %v740 = vadd.f32 %v738, %v739
        %v741 = vrot.slane %v740, 2
        %v742 = vadd.f32 %v740, %v741
        %v743 = vrot.slane %v742, 1
        %v744 = vadd.f32 %v742, %v743
        %v745 = vsel %vm694, %v744, 0.0
        %746 = vadd.xlane.f32.xlu0 %v745
        %v747 = vpop.xlane.xlu0 %746
        %v748 = vrot.slane %v747, 4
        %v749 = vadd.f32 %v747, %v748
        %v750 = vrot.slane %v749, 2
        %v751 = vadd.f32 %v749, %v750
        %v752 = vrot.slane %v751, 1
        %v753 = vadd.f32 %v751, %v752
        %s754 = vtos %v753
        %v755 = vsel %vm680, %v636, 0.0
        %v756 = vsel %vm680, %v637, 0.0
        %v757 = vadd.f32 %v755, %v756
        %v758 = vsel %vm680, %v638, 0.0
        %v759 = vadd.f32 %v757, %v758
        %v760 = vsel %vm680, %v639, 0.0
        %v761 = vadd.f32 %v759, %v760
        %v762 = vrot.slane %v761, 4
        %v763 = vadd.f32 %v761, %v762
        %v764 = vrot.slane %v763, 2
        %v765 = vadd.f32 %v763, %v764
        %v766 = vrot.slane %v765, 1
        %v767 = vadd.f32 %v765, %v766
        %v768 = vsel %vm694, %v767, 0.0
        %769 = vadd.xlane.f32.xlu0 %v768
        %v770 = vpop.xlane.xlu0 %769
        %v771 = vrot.slane %v770, 4
        %v772 = vadd.f32 %v770, %v771
        %v773 = vrot.slane %v772, 2
        %v774 = vadd.f32 %v772, %v773
        %v775 = vrot.slane %v774, 1
        %v776 = vadd.f32 %v774, %v775
        %s777 = vtos %v776
        %v778 = vsel %vm680, %v640, 0.0
        %v779 = vsel %vm680, %v641, 0.0
        %v780 = vadd.f32 %v778, %v779
        %v781 = vsel %vm680, %v642, 0.0
        %v782 = vadd.f32 %v780, %v781
        %v783 = vsel %vm680, %v643, 0.0
        %v784 = vadd.f32 %v782, %v783
        %v785 = vrot.slane %v784, 4
        %v786 = vadd.f32 %v784, %v785
        %v787 = vrot.slane %v786, 2
        %v788 = vadd.f32 %v786, %v787
        %v789 = vrot.slane %v788, 1
        %v790 = vadd.f32 %v788, %v789
        %v791 = vsel %vm694, %v790, 0.0
        %792 = vadd.xlane.f32.xlu0 %v791
        %v793 = vpop.xlane.xlu0 %792
        %v794 = vrot.slane %v793, 4
        %v795 = vadd.f32 %v793, %v794
        %v796 = vrot.slane %v795, 2
        %v797 = vadd.f32 %v795, %v796
        %v798 = vrot.slane %v797, 1
        %v799 = vadd.f32 %v797, %v798
        %s800 = vtos %v799
        %v801 = vmul.f32 %v660, %v676
        %v802 = vmul.f32 %v661, %v677
        %v803 = vmul.f32 %v662, %v678
        %v804 = vmul.f32 %v663, %v679
        %v805 = vsel %vm680, %v801, 0.0
        %v806 = vsel %vm680, %v802, 0.0
        %v807 = vadd.f32 %v805, %v806
        %v808 = vsel %vm680, %v803, 0.0
        %v809 = vadd.f32 %v807, %v808
        %v810 = vsel %vm680, %v804, 0.0
        %v811 = vadd.f32 %v809, %v810
        %v812 = vrot.slane %v811, 4
        %v813 = vadd.f32 %v811, %v812
        %v814 = vrot.slane %v813, 2
        %v815 = vadd.f32 %v813, %v814
        %v816 = vrot.slane %v815, 1
        %v817 = vadd.f32 %v815, %v816
        %v818 = vsel %vm694, %v817, 0.0
        %819 = vadd.xlane.f32.xlu0 %v818
        %v820 = vpop.xlane.xlu0 %819
        %v821 = vrot.slane %v820, 4
        %v822 = vadd.f32 %v820, %v821
        %v823 = vrot.slane %v822, 2
        %v824 = vadd.f32 %v822, %v823
        %v825 = vrot.slane %v824, 1
        %v826 = vadd.f32 %v824, %v825
        %s827 = vtos %v826
        %v828 = vsel %vm680, %v676, 0.0
        %v829 = vsel %vm680, %v677, 0.0
        %v830 = vadd.f32 %v828, %v829
        %v831 = vsel %vm680, %v678, 0.0
        %v832 = vadd.f32 %v830, %v831
        %v833 = vsel %vm680, %v679, 0.0
        %v834 = vadd.f32 %v832, %v833
        %v835 = vrot.slane %v834, 4
        %v836 = vadd.f32 %v834, %v835
        %v837 = vrot.slane %v836, 2
        %v838 = vadd.f32 %v836, %v837
        %v839 = vrot.slane %v838, 1
        %v840 = vadd.f32 %v838, %v839
        %v841 = vsel %vm694, %v840, 0.0
        %842 = vadd.xlane.f32.xlu0 %v841
        %v843 = vpop.xlane.xlu0 %842
        %v844 = vrot.slane %v843, 4
        %v845 = vadd.f32 %v843, %v844
        %v846 = vrot.slane %v845, 2
        %v847 = vadd.f32 %v845, %v846
        %v848 = vrot.slane %v847, 1
        %v849 = vadd.f32 %v847, %v848
        %s850 = vtos %v849
        %v851 = vmul.f32 %v644, %v644
        %v852 = vmul.f32 %v645, %v645
        %v853 = vmul.f32 %v646, %v646
        %v854 = vmul.f32 %v647, %v647
        %v855 = vmul.f32 %v648, %v648
        %v856 = vmul.f32 %v649, %v649
        %v857 = vmul.f32 %v650, %v650
        %v858 = vmul.f32 %v651, %v651
        %v859 = vmul.f32 %v652, %v652
        %v860 = vmul.f32 %v653, %v653
        %v861 = vmul.f32 %v654, %v654
        %v862 = vmul.f32 %v655, %v655
        %v863 = vmul.f32 %v851, %v664
        %v864 = vmul.f32 %v852, %v665
        %v865 = vmul.f32 %v853, %v666
        %v866 = vmul.f32 %v854, %v667
        %v867 = vmul.f32 %v855, %v664
        %v868 = vmul.f32 %v856, %v665
        %v869 = vmul.f32 %v857, %v666
        %v870 = vmul.f32 %v858, %v667
        %v871 = vmul.f32 %v859, %v664
        %v872 = vmul.f32 %v860, %v665
        %v873 = vmul.f32 %v861, %v666
        %v874 = vmul.f32 %v862, %v667
        %v875 = vadd.f32 %v863, 1e-06
        %v876 = vadd.f32 %v864, 1e-06
        %v877 = vadd.f32 %v865, 1e-06
        %v878 = vadd.f32 %v866, 1e-06
        %v879 = vadd.f32 %v867, 1e-06
        %v880 = vadd.f32 %v868, 1e-06
        %v881 = vadd.f32 %v869, 1e-06
        %v882 = vadd.f32 %v870, 1e-06
        %v883 = vadd.f32 %v871, 1e-06
        %v884 = vadd.f32 %v872, 1e-06
        %v885 = vadd.f32 %v873, 1e-06
        %v886 = vadd.f32 %v874, 1e-06
        %v887 = vrsqrt.pop %v875
        %v888 = vmul.f32 %v875, %v887
        %vm889 = vcmp.eq.f32.partialorder %v875, inf
        %v890 = vsel %vm889, %v875, %v888
        %vm891 = vcmp.eq.f32.partialorder %v875, 0.0
        %v892 = vand.u32 %v875, 2147483648
        %v893 = vsel %vm891, %v892, %v890
        %v894 = vrsqrt.pop %v876
        %v895 = vmul.f32 %v876, %v894
        %vm896 = vcmp.eq.f32.partialorder %v876, inf
        %v897 = vsel %vm896, %v876, %v895
        %vm898 = vcmp.eq.f32.partialorder %v876, 0.0
        %v899 = vand.u32 %v876, 2147483648
        %v900 = vsel %vm898, %v899, %v897
        %v901 = vrsqrt.pop %v877
        %v902 = vmul.f32 %v877, %v901
        %vm903 = vcmp.eq.f32.partialorder %v877, inf
        %v904 = vsel %vm903, %v877, %v902
        %vm905 = vcmp.eq.f32.partialorder %v877, 0.0
        %v906 = vand.u32 %v877, 2147483648
        %v907 = vsel %vm905, %v906, %v904
        %v908 = vrsqrt.pop %v878
        %v909 = vmul.f32 %v878, %v908
        %vm910 = vcmp.eq.f32.partialorder %v878, inf
        %v911 = vsel %vm910, %v878, %v909
        %vm912 = vcmp.eq.f32.partialorder %v878, 0.0
        %v913 = vand.u32 %v878, 2147483648
        %v914 = vsel %vm912, %v913, %v911
        %v915 = vrsqrt.pop %v879
        %v916 = vmul.f32 %v879, %v915
        %vm917 = vcmp.eq.f32.partialorder %v879, inf
        %v918 = vsel %vm917, %v879, %v916
        %vm919 = vcmp.eq.f32.partialorder %v879, 0.0
        %v920 = vand.u32 %v879, 2147483648
        %v921 = vsel %vm919, %v920, %v918
        %v922 = vrsqrt.pop %v880
        %v923 = vmul.f32 %v880, %v922
        %vm924 = vcmp.eq.f32.partialorder %v880, inf
        %v925 = vsel %vm924, %v880, %v923
        %vm926 = vcmp.eq.f32.partialorder %v880, 0.0
        %v927 = vand.u32 %v880, 2147483648
        %v928 = vsel %vm926, %v927, %v925
        %v929 = vrsqrt.pop %v881
        %v930 = vmul.f32 %v881, %v929
        %vm931 = vcmp.eq.f32.partialorder %v881, inf
        %v932 = vsel %vm931, %v881, %v930
        %vm933 = vcmp.eq.f32.partialorder %v881, 0.0
        %v934 = vand.u32 %v881, 2147483648
        %v935 = vsel %vm933, %v934, %v932
        %v936 = vrsqrt.pop %v882
        %v937 = vmul.f32 %v882, %v936
        %vm938 = vcmp.eq.f32.partialorder %v882, inf
        %v939 = vsel %vm938, %v882, %v937
        %vm940 = vcmp.eq.f32.partialorder %v882, 0.0
        %v941 = vand.u32 %v882, 2147483648
        %v942 = vsel %vm940, %v941, %v939
        %v943 = vrsqrt.pop %v883
        %v944 = vmul.f32 %v883, %v943
        %vm945 = vcmp.eq.f32.partialorder %v883, inf
        %v946 = vsel %vm945, %v883, %v944
        %vm947 = vcmp.eq.f32.partialorder %v883, 0.0
        %v948 = vand.u32 %v883, 2147483648
        %v949 = vsel %vm947, %v948, %v946
        %v950 = vrsqrt.pop %v884
        %v951 = vmul.f32 %v884, %v950
        %vm952 = vcmp.eq.f32.partialorder %v884, inf
        %v953 = vsel %vm952, %v884, %v951
        %vm954 = vcmp.eq.f32.partialorder %v884, 0.0
        %v955 = vand.u32 %v884, 2147483648
        %v956 = vsel %vm954, %v955, %v953
        %v957 = vrsqrt.pop %v885
        %v958 = vmul.f32 %v885, %v957
        %vm959 = vcmp.eq.f32.partialorder %v885, inf
        %v960 = vsel %vm959, %v885, %v958
        %vm961 = vcmp.eq.f32.partialorder %v885, 0.0
        %v962 = vand.u32 %v885, 2147483648
        %v963 = vsel %vm961, %v962, %v960
        %v964 = vrsqrt.pop %v886
        %v965 = vmul.f32 %v886, %v964
        %vm966 = vcmp.eq.f32.partialorder %v886, inf
        %v967 = vsel %vm966, %v886, %v965
        %vm968 = vcmp.eq.f32.partialorder %v886, 0.0
        %v969 = vand.u32 %v886, 2147483648
        %v970 = vsel %vm968, %v969, %v967
        %v971 = vsel %vm680, %v893, 0.0
        %v972 = vsel %vm680, %v921, 0.0
        %v973 = vadd.f32 %v971, %v972
        %v974 = vsel %vm680, %v949, 0.0
        %v975 = vadd.f32 %v973, %v974
        %v976 = vsel %vm680, %v900, 0.0
        %v977 = vsel %vm680, %v928, 0.0
        %v978 = vadd.f32 %v976, %v977
        %v979 = vsel %vm680, %v956, 0.0
        %v980 = vadd.f32 %v978, %v979
        %v981 = vsel %vm680, %v907, 0.0
        %v982 = vsel %vm680, %v935, 0.0
        %v983 = vadd.f32 %v981, %v982
        %v984 = vsel %vm680, %v963, 0.0
        %v985 = vadd.f32 %v983, %v984
        %v986 = vsel %vm680, %v914, 0.0
        %v987 = vsel %vm680, %v942, 0.0
        %v988 = vadd.f32 %v986, %v987
        %v989 = vsel %vm680, %v970, 0.0
        %v990 = vadd.f32 %v988, %v989
        %v991 = vsel %vm680, %v975, 0.0
        %v992 = vsel %vm680, %v980, 0.0
        %v993 = vadd.f32 %v991, %v992
        %v994 = vsel %vm680, %v985, 0.0
        %v995 = vadd.f32 %v993, %v994
        %v996 = vsel %vm680, %v990, 0.0
        %v997 = vadd.f32 %v995, %v996
        %v998 = vrot.slane %v997, 4
        %v999 = vadd.f32 %v997, %v998
        %v1000 = vrot.slane %v999, 2
        %v1001 = vadd.f32 %v999, %v1000
        %v1002 = vrot.slane %v1001, 1
        %v1003 = vadd.f32 %v1001, %v1002
        %v1004 = vsel %vm694, %v1003, 0.0
        %1005 = vadd.xlane.f32.xlu0 %v1004
        %v1006 = vpop.xlane.xlu0 %1005
        %v1007 = vrot.slane %v1006, 4
        %v1008 = vadd.f32 %v1006, %v1007
        %v1009 = vrot.slane %v1008, 2
        %v1010 = vadd.f32 %v1008, %v1009
        %v1011 = vrot.slane %v1010, 1
        %v1012 = vadd.f32 %v1010, %v1011
        %s1013 = vtos %v1012
        %v1014 = vld [vmem:[#allocation7] sm:$0xff]
        %v1015 = vld [vmem:[#allocation7 + $0x8] sm:$0xff]
        %v1016 = vld [vmem:[#allocation7 + $0x10] sm:$0xff]
        %v1017 = vld [vmem:[#allocation7 + $0x18] sm:$0xff]
        %v1018 = vld [vmem:[#allocation9] sm:$0xff]
        %v1019 = vld [vmem:[#allocation9 + $0x8] sm:$0xff]
        %v1020 = vld [vmem:[#allocation9 + $0x10] sm:$0xff]
        %v1021 = vld [vmem:[#allocation9 + $0x18] sm:$0xff]
        %v1023 = vsel %vm680, %v656, 0
        %v1026 = vsel %vm680, %v657, 0
        %v1029 = vsel %vm680, %v658, 0
        %v1032 = vsel %vm680, %v659, 0
        %1034 = vmatprep.subr.mxu0 0.0
        %1035 = vmatpush1.msra.mxu0 %v1018
        %1036 = vmatprep.subr.mxu0 0.0
        %1037 = vmatpush1.msra.mxu0 %v1019
        %1038 = vmatprep.subr.mxu0 0.0
        %1039 = vmatpush1.msra.mxu0 %v1020
        %1040 = vmatprep.subr.mxu0 0.0
        %1041 = vmatpush1.msra.mxu0 %v1021
        %1042 = vmatprep.subr.mxu0 0.0
        %1043 = vmatpush1.msra.mxu0 0.0
        %1044 = vmatprep.subr.mxu0 0.0
        %1045 = vmatpush1.msra.mxu0 0.0
        %1046 = vmatprep.subr.mxu0 0.0
        %1047 = vmatpush1.msra.mxu0 0.0
        %1048 = vmatprep.subr.mxu0 0.0
        %1049 = vmatpush1.msra.mxu0 0.0
        %1050 = vmatprep.subr.mxu0 0.0
        %1051 = vmatpush1.msra.mxu0 0.0
        %1052 = vmatprep.subr.mxu0 0.0
        %1053 = vmatpush1.msra.mxu0 0.0
        %1054 = vmatprep.subr.mxu0 0.0
        %1055 = vmatpush1.msra.mxu0 0.0
        %1056 = vmatprep.subr.mxu0 0.0
        %1057 = vmatpush1.msra.mxu0 0.0
        %1058 = vmatprep.subr.mxu0 0.0
        %1059 = vmatpush1.msra.mxu0 0.0
        %1060 = vmatprep.subr.mxu0 0.0
        %1061 = vmatpush1.msra.mxu0 0.0
        %1062 = vmatprep.subr.mxu0 0.0
        %1063 = vmatpush1.msra.mxu0 0.0
        %1064 = vmatprep.subr.mxu0 0.0
        %1065 = vmatpush1.msra.mxu0 0.0
        %1066 = vmatprep.subr.mxu0 0.0
        %1067 = vmatpush1.msra.mxu0 0.0
        %1068 = vmatprep.subr.mxu0 0.0
        %1069 = vmatpush1.msra.mxu0 0.0
        %1070 = vmatprep.subr.mxu0 0.0
        %1071 = vmatpush1.msra.mxu0 0.0
        %1072 = vmatprep.subr.mxu0 0.0
        %1073 = vmatpush1.msra.mxu0 0.0
        %1074 = vmatprep.subr.mxu0 0.0
        %1075 = vmatpush1.msra.mxu0 0.0
        %1076 = vmatprep.subr.mxu0 0.0
        %1077 = vmatpush1.msra.mxu0 0.0
        %1078 = vmatprep.subr.mxu0 0.0
        %1079 = vmatpush1.msra.mxu0 0.0
        %1080 = vmatprep.subr.mxu0 0.0
        %1081 = vmatpush1.msra.mxu0 0.0
        %1082 = vmatprep.subr.mxu0 0.0
        %1083 = vmatpush1.msra.mxu0 0.0
        %1084 = vmatprep.subr.mxu0 0.0
        %1085 = vmatpush1.msra.mxu0 0.0
        %1086 = vmatprep.subr.mxu0 0.0
        %1087 = vmatpush1.msra.mxu0 0.0
        %1088 = vmatprep.subr.mxu0 0.0
        %1089 = vmatpush1.msra.mxu0 0.0
        %1090 = vmatprep.subr.mxu0 0.0
        %1091 = vmatpush1.msra.mxu0 0.0
        %1092 = vmatprep.subr.mxu0 0.0
        %1093 = vmatpush1.msra.mxu0 0.0
        %1094 = vmatprep.subr.mxu0 0.0
        %1095 = vmatpush1.msra.mxu0 0.0
        %1096 = vmatprep.subr.mxu0 0.0
        %1097 = vmatpush1.msra.mxu0 0.0
        %1098 = vmatprep.mubr.f32.mxu0 0.0
        %1099 = vmatmul.mubr.f32.gmra.mrb[0].mxu0 %v1023
        %v1100 = vpop.f32.mrb[0].mxu0
        %v1101 = vadd.f32 0.0, %v1100
        %v1102 = vpop.f32.mrb[0].mxu0
        %1103 = vmatprep.mubr.f32.mxu0 0.0
        %1104 = vmatmul.mubr.f32.gmra.mrb[0].mxu0 %v1026
        %v1105 = vpop.f32.mrb[0].mxu0
        %v1106 = vadd.f32 0.0, %v1105
        %v1107 = vpop.f32.mrb[0].mxu0
        %1108 = vmatprep.mubr.f32.mxu0 0.0
        %1109 = vmatmul.mubr.f32.gmra.mrb[0].mxu0 %v1029
        %v1110 = vpop.f32.mrb[0].mxu0
        %v1111 = vadd.f32 0.0, %v1110
        %v1112 = vpop.f32.mrb[0].mxu0
        %1113 = vmatprep.mubr.f32.mxu0 0.0
        %1114 = vmatmul.mubr.f32.gmra.mrb[0].mxu0 %v1032
        %v1115 = vpop.f32.mrb[0].mxu0
        %v1116 = vadd.f32 0.0, %v1115
        %v1117 = vpop.f32.mrb[0].mxu0
        %1118 = vdwg.mxu0
        %v1120 = vsel %vm680, %v1014, 0
        %v1123 = vsel %vm680, %v1015, 0
        %v1126 = vsel %vm680, %v1016, 0
        %v1129 = vsel %vm680, %v1017, 0
        %1131 = vmatprep.subr.mxu0 0.0
        %1132 = vmatpush1.msra.mxu0 %v1101
        %1133 = vmatprep.subr.mxu0 0.0
        %1134 = vmatpush1.msra.mxu0 %v1106
        %1135 = vmatprep.subr.mxu0 0.0
        %1136 = vmatpush1.msra.mxu0 %v1111
        %1137 = vmatprep.subr.mxu0 0.0
        %1138 = vmatpush1.msra.mxu0 %v1116
        %1139 = vmatprep.subr.mxu0 0.0
        %1140 = vmatpush1.msra.mxu0 0.0
        %1141 = vmatprep.subr.mxu0 0.0
        %1142 = vmatpush1.msra.mxu0 0.0
        %1143 = vmatprep.subr.mxu0 0.0
        %1144 = vmatpush1.msra.mxu0 0.0
        %1145 = vmatprep.subr.mxu0 0.0
        %1146 = vmatpush1.msra.mxu0 0.0
        %1147 = vmatprep.subr.mxu0 0.0
        %1148 = vmatpush1.msra.mxu0 0.0
        %1149 = vmatprep.subr.mxu0 0.0
        %1150 = vmatpush1.msra.mxu0 0.0
        %1151 = vmatprep.subr.mxu0 0.0
        %1152 = vmatpush1.msra.mxu0 0.0
        %1153 = vmatprep.subr.mxu0 0.0
        %1154 = vmatpush1.msra.mxu0 0.0
        %1155 = vmatprep.subr.mxu0 0.0
        %1156 = vmatpush1.msra.mxu0 0.0
        %1157 = vmatprep.subr.mxu0 0.0
        %1158 = vmatpush1.msra.mxu0 0.0
        %1159 = vmatprep.subr.mxu0 0.0
        %1160 = vmatpush1.msra.mxu0 0.0
        %1161 = vmatprep.subr.mxu0 0.0
        %1162 = vmatpush1.msra.mxu0 0.0
        %1163 = vmatprep.subr.mxu0 0.0
        %1164 = vmatpush1.msra.mxu0 0.0
        %1165 = vmatprep.subr.mxu0 0.0
        %1166 = vmatpush1.msra.mxu0 0.0
        %1167 = vmatprep.subr.mxu0 0.0
        %1168 = vmatpush1.msra.mxu0 0.0
        %1169 = vmatprep.subr.mxu0 0.0
        %1170 = vmatpush1.msra.mxu0 0.0
        %1171 = vmatprep.subr.mxu0 0.0
        %1172 = vmatpush1.msra.mxu0 0.0
        %1173 = vmatprep.subr.mxu0 0.0
        %1174 = vmatpush1.msra.mxu0 0.0
        %1175 = vmatprep.subr.mxu0 0.0
        %1176 = vmatpush1.msra.mxu0 0.0
        %1177 = vmatprep.subr.mxu0 0.0
        %1178 = vmatpush1.msra.mxu0 0.0
        %1179 = vmatprep.subr.mxu0 0.0
        %1180 = vmatpush1.msra.mxu0 0.0
        %1181 = vmatprep.subr.mxu0 0.0
        %1182 = vmatpush1.msra.mxu0 0.0
        %1183 = vmatprep.subr.mxu0 0.0
        %1184 = vmatpush1.msra.mxu0 0.0
        %1185 = vmatprep.subr.mxu0 0.0
        %1186 = vmatpush1.msra.mxu0 0.0
        %1187 = vmatprep.subr.mxu0 0.0
        %1188 = vmatpush1.msra.mxu0 0.0
        %1189 = vmatprep.subr.mxu0 0.0
        %1190 = vmatpush1.msra.mxu0 0.0
        %1191 = vmatprep.subr.mxu0 0.0
        %1192 = vmatpush1.msra.mxu0 0.0
        %1193 = vmatprep.subr.mxu0 0.0
        %1194 = vmatpush1.msra.mxu0 0.0
        %1195 = vmatprep.mubr.f32.mxu0 0.0
        %1196 = vmatmul.mubr.f32.gmra.mrb[0].mxu0 %v1120
        %v1197 = vpop.f32.mrb[0].mxu0
        %v1198 = vadd.f32 0.0, %v1197
        %v1199 = vpop.f32.mrb[0].mxu0
        %1200 = vmatprep.mubr.f32.mxu0 0.0
        %1201 = vmatmul.mubr.f32.gmra.mrb[0].mxu0 %v1123
        %v1202 = vpop.f32.mrb[0].mxu0
        %v1203 = vadd.f32 0.0, %v1202
        %v1204 = vpop.f32.mrb[0].mxu0
        %1205 = vmatprep.mubr.f32.mxu0 0.0
        %1206 = vmatmul.mubr.f32.gmra.mrb[0].mxu0 %v1126
        %v1207 = vpop.f32.mrb[0].mxu0
        %v1208 = vadd.f32 0.0, %v1207
        %v1209 = vpop.f32.mrb[0].mxu0
        %1210 = vmatprep.mubr.f32.mxu0 0.0
        %1211 = vmatmul.mubr.f32.gmra.mrb[0].mxu0 %v1129
        %v1212 = vpop.f32.mrb[0].mxu0
        %v1213 = vadd.f32 0.0, %v1212
        %v1214 = vpop.f32.mrb[0].mxu0
        %1215 = vdwg.mxu0
        %v1216 = vmul.f32 %v656, 9.0
        %v1217 = vmul.f32 %v657, 9.0
        %v1218 = vmul.f32 %v658, 9.0
        %v1219 = vmul.f32 %v659, 9.0
        %v1220 = vsub.f32 %v1198, %v1216
        %v1221 = vsub.f32 %v1203, %v1217
        %v1222 = vsub.f32 %v1208, %v1218
        %v1223 = vsub.f32 %v1213, %v1219
        %v1224 = vand.u32 2147483647, %v1220
        %v1225 = vand.u32 2147483647, %v1221
        %v1226 = vand.u32 2147483647, %v1222
        %v1227 = vand.u32 2147483647, %v1223
        %v1228 = vsel %vm680, %v1224, 0.0
        %v1229 = vsel %vm680, %v1225, 0.0
        %v1230 = vadd.f32 %v1228, %v1229
        %v1231 = vsel %vm680, %v1226, 0.0
        %v1232 = vadd.f32 %v1230, %v1231
        %v1233 = vsel %vm680, %v1227, 0.0
        %v1234 = vadd.f32 %v1232, %v1233
        %v1235 = vrot.slane %v1234, 4
        %v1236 = vadd.f32 %v1234, %v1235
        %v1237 = vrot.slane %v1236, 2
        %v1238 = vadd.f32 %v1236, %v1237
        %v1239 = vrot.slane %v1238, 1
        %v1240 = vadd.f32 %v1238, %v1239
        %v1241 = vsel %vm694, %v1240, 0.0
        %1242 = vadd.xlane.f32.xlu0 %v1241
        %v1243 = vpop.xlane.xlu0 %1242
        %v1244 = vrot.slane %v1243, 4
        %v1245 = vadd.f32 %v1243, %v1244
        %v1246 = vrot.slane %v1245, 2
        %v1247 = vadd.f32 %v1245, %v1246
        %v1248 = vrot.slane %v1247, 1
        %v1249 = vadd.f32 %v1247, %v1248
        %s1250 = vtos %v1249
        %v1251 = vld [vmem:[#allocation10] sm:$0xff]
        %v1252 = vld [vmem:[#allocation10 + $0x8] sm:$0xff]
        %v1253 = vld [vmem:[#allocation10 + $0x10] sm:$0xff]
        %v1254 = vld [vmem:[#allocation10 + $0x18] sm:$0xff]
        %v1255 = vld [vmem:[#allocation12] sm:$0xff]
        %v1256 = vld [vmem:[#allocation12 + $0x8] sm:$0xff]
        %v1257 = vld [vmem:[#allocation12 + $0x10] sm:$0xff]
        %v1258 = vld [vmem:[#allocation12 + $0x18] sm:$0xff]
        %1259 = vmatprep.subr.mxu0 0.0
        %1260 = vmatpush1.msra.mxu0 %v1255
        %1261 = vmatprep.subr.mxu0 0.0
        %1262 = vmatpush1.msra.mxu0 %v1256
        %1263 = vmatprep.subr.mxu0 0.0
        %1264 = vmatpush1.msra.mxu0 %v1257
        %1265 = vmatprep.subr.mxu0 0.0
        %1266 = vmatpush1.msra.mxu0 %v1258
        %1267 = vmatprep.subr.mxu0 0.0
        %1268 = vmatpush1.msra.mxu0 0.0
        %1269 = vmatprep.subr.mxu0 0.0
        %1270 = vmatpush1.msra.mxu0 0.0
        %1271 = vmatprep.subr.mxu0 0.0
        %1272 = vmatpush1.msra.mxu0 0.0
        %1273 = vmatprep.subr.mxu0 0.0
        %1274 = vmatpush1.msra.mxu0 0.0
        %1275 = vmatprep.subr.mxu0 0.0
        %1276 = vmatpush1.msra.mxu0 0.0
        %1277 = vmatprep.subr.mxu0 0.0
        %1278 = vmatpush1.msra.mxu0 0.0
        %1279 = vmatprep.subr.mxu0 0.0
        %1280 = vmatpush1.msra.mxu0 0.0
        %1281 = vmatprep.subr.mxu0 0.0
        %1282 = vmatpush1.msra.mxu0 0.0
        %1283 = vmatprep.subr.mxu0 0.0
        %1284 = vmatpush1.msra.mxu0 0.0
        %1285 = vmatprep.subr.mxu0 0.0
        %1286 = vmatpush1.msra.mxu0 0.0
        %1287 = vmatprep.subr.mxu0 0.0
        %1288 = vmatpush1.msra.mxu0 0.0
        %1289 = vmatprep.subr.mxu0 0.0
        %1290 = vmatpush1.msra.mxu0 0.0
        %1291 = vmatprep.subr.mxu0 0.0
        %1292 = vmatpush1.msra.mxu0 0.0
        %1293 = vmatprep.subr.mxu0 0.0
        %1294 = vmatpush1.msra.mxu0 0.0
        %1295 = vmatprep.subr.mxu0 0.0
        %1296 = vmatpush1.msra.mxu0 0.0
        %1297 = vmatprep.subr.mxu0 0.0
        %1298 = vmatpush1.msra.mxu0 0.0
        %1299 = vmatprep.subr.mxu0 0.0
        %1300 = vmatpush1.msra.mxu0 0.0
        %1301 = vmatprep.subr.mxu0 0.0
        %1302 = vmatpush1.msra.mxu0 0.0
        %1303 = vmatprep.subr.mxu0 0.0
        %1304 = vmatpush1.msra.mxu0 0.0
        %1305 = vmatprep.subr.mxu0 0.0
        %1306 = vmatpush1.msra.mxu0 0.0
        %1307 = vmatprep.subr.mxu0 0.0
        %1308 = vmatpush1.msra.mxu0 0.0
        %1309 = vmatprep.subr.mxu0 0.0
        %1310 = vmatpush1.msra.mxu0 0.0
        %1311 = vmatprep.subr.mxu0 0.0
        %1312 = vmatpush1.msra.mxu0 0.0
        %1313 = vmatprep.subr.mxu0 0.0
        %1314 = vmatpush1.msra.mxu0 0.0
        %1315 = vmatprep.subr.mxu0 0.0
        %1316 = vmatpush1.msra.mxu0 0.0
        %1317 = vmatprep.subr.mxu0 0.0
        %1318 = vmatpush1.msra.mxu0 0.0
        %1319 = vmatprep.subr.mxu0 0.0
        %1320 = vmatpush1.msra.mxu0 0.0
        %1321 = vmatprep.subr.mxu0 0.0
        %1322 = vmatpush1.msra.mxu0 0.0
        %1323 = vmatprep.mubr.f32.mxu0 0.0
        %1324 = vmatmul.mubr.f32.gmra.mrb[0].mxu0 %v1023
        %v1325 = vpop.f32.mrb[0].mxu0
        %v1326 = vadd.f32 0.0, %v1325
        %v1327 = vpop.f32.mrb[0].mxu0
        %1328 = vmatprep.mubr.f32.mxu0 0.0
        %1329 = vmatmul.mubr.f32.gmra.mrb[0].mxu0 %v1026
        %v1330 = vpop.f32.mrb[0].mxu0
        %v1331 = vadd.f32 0.0, %v1330
        %v1332 = vpop.f32.mrb[0].mxu0
        %1333 = vmatprep.mubr.f32.mxu0 0.0
        %1334 = vmatmul.mubr.f32.gmra.mrb[0].mxu0 %v1029
        %v1335 = vpop.f32.mrb[0].mxu0
        %v1336 = vadd.f32 0.0, %v1335
        %v1337 = vpop.f32.mrb[0].mxu0
        %1338 = vmatprep.mubr.f32.mxu0 0.0
        %1339 = vmatmul.mubr.f32.gmra.mrb[0].mxu0 %v1032
        %v1340 = vpop.f32.mrb[0].mxu0
        %v1341 = vadd.f32 0.0, %v1340
        %v1342 = vpop.f32.mrb[0].mxu0
        %1343 = vdwg.mxu0
        %v1345 = vsel %vm680, %v1251, 0
        %v1348 = vsel %vm680, %v1252, 0
        %v1351 = vsel %vm680, %v1253, 0
        %v1354 = vsel %vm680, %v1254, 0
        %1356 = vmatprep.subr.mxu0 0.0
        %1357 = vmatpush1.msra.mxu0 %v1326
        %1358 = vmatprep.subr.mxu0 0.0
        %1359 = vmatpush1.msra.mxu0 %v1331
        %1360 = vmatprep.subr.mxu0 0.0
        %1361 = vmatpush1.msra.mxu0 %v1336
        %1362 = vmatprep.subr.mxu0 0.0
        %1363 = vmatpush1.msra.mxu0 %v1341
        %1364 = vmatprep.subr.mxu0 0.0
        %1365 = vmatpush1.msra.mxu0 0.0
        %1366 = vmatprep.subr.mxu0 0.0
        %1367 = vmatpush1.msra.mxu0 0.0
        %1368 = vmatprep.subr.mxu0 0.0
        %1369 = vmatpush1.msra.mxu0 0.0
        %1370 = vmatprep.subr.mxu0 0.0
        %1371 = vmatpush1.msra.mxu0 0.0
        %1372 = vmatprep.subr.mxu0 0.0
        %1373 = vmatpush1.msra.mxu0 0.0
        %1374 = vmatprep.subr.mxu0 0.0
        %1375 = vmatpush1.msra.mxu0 0.0
        %1376 = vmatprep.subr.mxu0 0.0
        %1377 = vmatpush1.msra.mxu0 0.0
        %1378 = vmatprep.subr.mxu0 0.0
        %1379 = vmatpush1.msra.mxu0 0.0
        %1380 = vmatprep.subr.mxu0 0.0
        %1381 = vmatpush1.msra.mxu0 0.0
        %1382 = vmatprep.subr.mxu0 0.0
        %1383 = vmatpush1.msra.mxu0 0.0
        %1384 = vmatprep.subr.mxu0 0.0
        %1385 = vmatpush1.msra.mxu0 0.0
        %1386 = vmatprep.subr.mxu0 0.0
        %1387 = vmatpush1.msra.mxu0 0.0
        %1388 = vmatprep.subr.mxu0 0.0
        %1389 = vmatpush1.msra.mxu0 0.0
        %1390 = vmatprep.subr.mxu0 0.0
        %1391 = vmatpush1.msra.mxu0 0.0
        %1392 = vmatprep.subr.mxu0 0.0
        %1393 = vmatpush1.msra.mxu0 0.0
        %1394 = vmatprep.subr.mxu0 0.0
        %1395 = vmatpush1.msra.mxu0 0.0
        %1396 = vmatprep.subr.mxu0 0.0
        %1397 = vmatpush1.msra.mxu0 0.0
        %1398 = vmatprep.subr.mxu0 0.0
        %1399 = vmatpush1.msra.mxu0 0.0
        %1400 = vmatprep.subr.mxu0 0.0
        %1401 = vmatpush1.msra.mxu0 0.0
        %1402 = vmatprep.subr.mxu0 0.0
        %1403 = vmatpush1.msra.mxu0 0.0
        %1404 = vmatprep.subr.mxu0 0.0
        %1405 = vmatpush1.msra.mxu0 0.0
        %1406 = vmatprep.subr.mxu0 0.0
        %1407 = vmatpush1.msra.mxu0 0.0
        %1408 = vmatprep.subr.mxu0 0.0
        %1409 = vmatpush1.msra.mxu0 0.0
        %1410 = vmatprep.subr.mxu0 0.0
        %1411 = vmatpush1.msra.mxu0 0.0
        %1412 = vmatprep.subr.mxu0 0.0
        %1413 = vmatpush1.msra.mxu0 0.0
        %1414 = vmatprep.subr.mxu0 0.0
        %1415 = vmatpush1.msra.mxu0 0.0
        %1416 = vmatprep.subr.mxu0 0.0
        %1417 = vmatpush1.msra.mxu0 0.0
        %1418 = vmatprep.subr.mxu0 0.0
        %1419 = vmatpush1.msra.mxu0 0.0
        %1420 = vmatprep.mubr.f32.mxu0 0.0
        %1421 = vmatmul.mubr.f32.gmra.mrb[0].mxu0 %v1345
        %v1422 = vpop.f32.mrb[0].mxu0
        %v1423 = vadd.f32 0.0, %v1422
        %v1424 = vpop.f32.mrb[0].mxu0
        %1425 = vmatprep.mubr.f32.mxu0 0.0
        %1426 = vmatmul.mubr.f32.gmra.mrb[0].mxu0 %v1348
        %v1427 = vpop.f32.mrb[0].mxu0
        %v1428 = vadd.f32 0.0, %v1427
        %v1429 = vpop.f32.mrb[0].mxu0
        %1430 = vmatprep.mubr.f32.mxu0 0.0
        %1431 = vmatmul.mubr.f32.gmra.mrb[0].mxu0 %v1351
        %v1432 = vpop.f32.mrb[0].mxu0
        %v1433 = vadd.f32 0.0, %v1432
        %v1434 = vpop.f32.mrb[0].mxu0
        %1435 = vmatprep.mubr.f32.mxu0 0.0
        %1436 = vmatmul.mubr.f32.gmra.mrb[0].mxu0 %v1354
        %v1437 = vpop.f32.mrb[0].mxu0
        %v1438 = vadd.f32 0.0, %v1437
        %v1439 = vpop.f32.mrb[0].mxu0
        %1440 = vdwg.mxu0
        %v1441 = vsub.f32 %v656, %v1423
        %v1442 = vsub.f32 %v657, %v1428
        %v1443 = vsub.f32 %v658, %v1433
        %v1444 = vsub.f32 %v659, %v1438
        %v1445 = vand.u32 2147483647, %v1441
        %v1446 = vand.u32 2147483647, %v1442
        %v1447 = vand.u32 2147483647, %v1443
        %v1448 = vand.u32 2147483647, %v1444
        %v1449 = vsel %vm680, %v1445, 0.0
        %v1450 = vsel %vm680, %v1446, 0.0
        %v1451 = vadd.f32 %v1449, %v1450
        %v1452 = vsel %vm680, %v1447, 0.0
        %v1453 = vadd.f32 %v1451, %v1452
        %v1454 = vsel %vm680, %v1448, 0.0
        %v1455 = vadd.f32 %v1453, %v1454
        %v1456 = vrot.slane %v1455, 4
        %v1457 = vadd.f32 %v1455, %v1456
        %v1458 = vrot.slane %v1457, 2
        %v1459 = vadd.f32 %v1457, %v1458
        %v1460 = vrot.slane %v1459, 1
        %v1461 = vadd.f32 %v1459, %v1460
        %v1462 = vsel %vm694, %v1461, 0.0
        %1463 = vadd.xlane.f32.xlu0 %v1462
        %v1464 = vpop.xlane.xlu0 %1463
        %v1465 = vrot.slane %v1464, 4
        %v1466 = vadd.f32 %v1464, %v1465
        %v1467 = vrot.slane %v1466, 2
        %v1468 = vadd.f32 %v1466, %v1467
        %v1469 = vrot.slane %v1468, 1
        %v1470 = vadd.f32 %v1468, %v1469
        %s1471 = vtos %v1470
        %v1472 = vld [vmem:[#allocation13] sm:$0xff]
        %v1473 = vld [vmem:[#allocation13 + $0x8] sm:$0xff]
        %v1474 = vld [vmem:[%s8] sm:$0xff]
        %v1475 = vld [vmem:[%s8 + $0x8] sm:$0xff]
        %v1476 = vld [vmem:[%s8 + $0x10] sm:$0xff]
        %v1477 = vld [vmem:[%s8 + $0x18] sm:$0xff]
        %1478 = vmatprep.subr.mxu0 0.0
        %1479 = vmatpush1.msra.mxu0 %v1474
        %1480 = vmatprep.subr.mxu0 0.0
        %1481 = vmatpush1.msra.mxu0 %v1475
        %1482 = vmatprep.subr.mxu0 0.0
        %1483 = vmatpush1.msra.mxu0 %v1476
        %1484 = vmatprep.subr.mxu0 0.0
        %1485 = vmatpush1.msra.mxu0 %v1477
        %1486 = vmatprep.subr.mxu0 0.0
        %1487 = vmatpush1.msra.mxu0 0.0
        %1488 = vmatprep.subr.mxu0 0.0
        %1489 = vmatpush1.msra.mxu0 0.0
        %1490 = vmatprep.subr.mxu0 0.0
        %1491 = vmatpush1.msra.mxu0 0.0
        %1492 = vmatprep.subr.mxu0 0.0
        %1493 = vmatpush1.msra.mxu0 0.0
        %1494 = vmatprep.subr.mxu0 0.0
        %1495 = vmatpush1.msra.mxu0 0.0
        %1496 = vmatprep.subr.mxu0 0.0
        %1497 = vmatpush1.msra.mxu0 0.0
        %1498 = vmatprep.subr.mxu0 0.0
        %1499 = vmatpush1.msra.mxu0 0.0
        %1500 = vmatprep.subr.mxu0 0.0
        %1501 = vmatpush1.msra.mxu0 0.0
        %1502 = vmatprep.subr.mxu0 0.0
        %1503 = vmatpush1.msra.mxu0 0.0
        %1504 = vmatprep.subr.mxu0 0.0
        %1505 = vmatpush1.msra.mxu0 0.0
        %1506 = vmatprep.subr.mxu0 0.0
        %1507 = vmatpush1.msra.mxu0 0.0
        %1508 = vmatprep.subr.mxu0 0.0
        %1509 = vmatpush1.msra.mxu0 0.0
        %1510 = vmatprep.subr.mxu0 0.0
        %1511 = vmatpush1.msra.mxu0 0.0
        %1512 = vmatprep.subr.mxu0 0.0
        %1513 = vmatpush1.msra.mxu0 0.0
        %1514 = vmatprep.subr.mxu0 0.0
        %1515 = vmatpush1.msra.mxu0 0.0
        %1516 = vmatprep.subr.mxu0 0.0
        %1517 = vmatpush1.msra.mxu0 0.0
        %1518 = vmatprep.subr.mxu0 0.0
        %1519 = vmatpush1.msra.mxu0 0.0
        %1520 = vmatprep.subr.mxu0 0.0
        %1521 = vmatpush1.msra.mxu0 0.0
        %1522 = vmatprep.subr.mxu0 0.0
        %1523 = vmatpush1.msra.mxu0 0.0
        %1524 = vmatprep.subr.mxu0 0.0
        %1525 = vmatpush1.msra.mxu0 0.0
        %1526 = vmatprep.subr.mxu0 0.0
        %1527 = vmatpush1.msra.mxu0 0.0
        %1528 = vmatprep.subr.mxu0 0.0
        %1529 = vmatpush1.msra.mxu0 0.0
        %1530 = vmatprep.subr.mxu0 0.0
        %1531 = vmatpush1.msra.mxu0 0.0
        %1532 = vmatprep.subr.mxu0 0.0
        %1533 = vmatpush1.msra.mxu0 0.0
        %1534 = vmatprep.subr.mxu0 0.0
        %1535 = vmatpush1.msra.mxu0 0.0
        %1536 = vmatprep.subr.mxu0 0.0
        %1537 = vmatpush1.msra.mxu0 0.0
        %1538 = vmatprep.subr.mxu0 0.0
        %1539 = vmatpush1.msra.mxu0 0.0
        %1540 = vmatprep.subr.mxu0 0.0
        %1541 = vmatpush1.msra.mxu0 0.0
        %1542 = vmatprep.mubr.f32.mxu0 0.0
        %1543 = vmatmul.mubr.f32.gmra.mrb[0].mxu0 %v1023
        %v1544 = vpop.f32.mrb[0].mxu0
        %v1545 = vadd.f32 0.0, %v1544
        %v1546 = vpop.f32.mrb[0].mxu0
        %1547 = vmatprep.mubr.f32.mxu0 0.0
        %1548 = vmatmul.mubr.f32.gmra.mrb[0].mxu0 %v1026
        %v1549 = vpop.f32.mrb[0].mxu0
        %v1550 = vadd.f32 0.0, %v1549
        %v1551 = vpop.f32.mrb[0].mxu0
        %1552 = vmatprep.mubr.f32.mxu0 0.0
        %1553 = vmatmul.mubr.f32.gmra.mrb[0].mxu0 %v1029
        %v1554 = vpop.f32.mrb[0].mxu0
        %v1555 = vadd.f32 0.0, %v1554
        %v1556 = vpop.f32.mrb[0].mxu0
        %1557 = vmatprep.mubr.f32.mxu0 0.0
        %1558 = vmatmul.mubr.f32.gmra.mrb[0].mxu0 %v1032
        %v1559 = vpop.f32.mrb[0].mxu0
        %v1560 = vadd.f32 0.0, %v1559
        %v1561 = vpop.f32.mrb[0].mxu0
        %1562 = vdwg.mxu0
        %v1564 = vsel %vm680, %v1472, 0
        %v1567 = vsel %vm680, %v1473, 0
        %1569 = vmatprep.subr.mxu0 0.0
        %1570 = vmatpush1.msra.mxu0 %v1545
        %1571 = vmatprep.subr.mxu0 0.0
        %1572 = vmatpush1.msra.mxu0 %v1550
        %1573 = vmatprep.subr.mxu0 0.0
        %1574 = vmatpush1.msra.mxu0 %v1555
        %1575 = vmatprep.subr.mxu0 0.0
        %1576 = vmatpush1.msra.mxu0 %v1560
        %1577 = vmatprep.subr.mxu0 0.0
        %1578 = vmatpush1.msra.mxu0 0.0
        %1579 = vmatprep.subr.mxu0 0.0
        %1580 = vmatpush1.msra.mxu0 0.0
        %1581 = vmatprep.subr.mxu0 0.0
        %1582 = vmatpush1.msra.mxu0 0.0
        %1583 = vmatprep.subr.mxu0 0.0
        %1584 = vmatpush1.msra.mxu0 0.0
        %1585 = vmatprep.subr.mxu0 0.0
        %1586 = vmatpush1.msra.mxu0 0.0
        %1587 = vmatprep.subr.mxu0 0.0
        %1588 = vmatpush1.msra.mxu0 0.0
        %1589 = vmatprep.subr.mxu0 0.0
        %1590 = vmatpush1.msra.mxu0 0.0
        %1591 = vmatprep.subr.mxu0 0.0
        %1592 = vmatpush1.msra.mxu0 0.0
        %1593 = vmatprep.subr.mxu0 0.0
        %1594 = vmatpush1.msra.mxu0 0.0
        %1595 = vmatprep.subr.mxu0 0.0
        %1596 = vmatpush1.msra.mxu0 0.0
        %1597 = vmatprep.subr.mxu0 0.0
        %1598 = vmatpush1.msra.mxu0 0.0
        %1599 = vmatprep.subr.mxu0 0.0
        %1600 = vmatpush1.msra.mxu0 0.0
        %1601 = vmatprep.subr.mxu0 0.0
        %1602 = vmatpush1.msra.mxu0 0.0
        %1603 = vmatprep.subr.mxu0 0.0
        %1604 = vmatpush1.msra.mxu0 0.0
        %1605 = vmatprep.subr.mxu0 0.0
        %1606 = vmatpush1.msra.mxu0 0.0
        %1607 = vmatprep.subr.mxu0 0.0
        %1608 = vmatpush1.msra.mxu0 0.0
        %1609 = vmatprep.subr.mxu0 0.0
        %1610 = vmatpush1.msra.mxu0 0.0
        %1611 = vmatprep.subr.mxu0 0.0
        %1612 = vmatpush1.msra.mxu0 0.0
        %1613 = vmatprep.subr.mxu0 0.0
        %1614 = vmatpush1.msra.mxu0 0.0
        %1615 = vmatprep.subr.mxu0 0.0
        %1616 = vmatpush1.msra.mxu0 0.0
        %1617 = vmatprep.subr.mxu0 0.0
        %1618 = vmatpush1.msra.mxu0 0.0
        %1619 = vmatprep.subr.mxu0 0.0
        %1620 = vmatpush1.msra.mxu0 0.0
        %1621 = vmatprep.subr.mxu0 0.0
        %1622 = vmatpush1.msra.mxu0 0.0
        %1623 = vmatprep.subr.mxu0 0.0
        %1624 = vmatpush1.msra.mxu0 0.0
        %1625 = vmatprep.subr.mxu0 0.0
        %1626 = vmatpush1.msra.mxu0 0.0
        %1627 = vmatprep.subr.mxu0 0.0
        %1628 = vmatpush1.msra.mxu0 0.0
        %1629 = vmatprep.subr.mxu0 0.0
        %1630 = vmatpush1.msra.mxu0 0.0
        %1631 = vmatprep.subr.mxu0 0.0
        %1632 = vmatpush1.msra.mxu0 0.0
        %1633 = vmatprep.mubr.f32.mxu0 0.0
        %1634 = vmatmul.mubr.f32.gmra.mrb[0].mxu0 %v1564
        %v1635 = vpop.f32.mrb[0].mxu0
        %v1636 = vadd.f32 0.0, %v1635
        %v1637 = vpop.f32.mrb[0].mxu0
        %1638 = vmatprep.mubr.f32.mxu0 0.0
        %1639 = vmatmul.mubr.f32.gmra.mrb[0].mxu0 %v1567
        %v1640 = vpop.f32.mrb[0].mxu0
        %v1641 = vadd.f32 0.0, %v1640
        %v1642 = vpop.f32.mrb[0].mxu0
        %1643 = vdwg.mxu0
        %v1644 = vld [vmem:[#allocation15] sm:$0xff]
        %v1645 = vld [vmem:[#allocation15 + $0x8] sm:$0xff]
        %v1646 = vld [vmem:[%s10] sm:$0xff]
        %v1647 = vld [vmem:[%s10 + $0x8] sm:$0xff]
        %vm1648 = vcmask 130048
        %v1650 = vsel %vm1648, %v1636, 0
        %v1653 = vsel %vm1648, %v1641, 0
        %1655 = vmatprep.subr.mxu0 0.0
        %1656 = vmatpush1.msra.mxu0 %v1646
        %1657 = vmatprep.subr.mxu0 0.0
        %1658 = vmatpush1.msra.mxu0 %v1647
        %1659 = vmatprep.subr.mxu0 0.0
        %1660 = vmatpush1.msra.mxu0 0.0
        %1661 = vmatprep.subr.mxu0 0.0
        %1662 = vmatpush1.msra.mxu0 0.0
        %1663 = vmatprep.subr.mxu0 0.0
        %1664 = vmatpush1.msra.mxu0 0.0
        %1665 = vmatprep.subr.mxu0 0.0
        %1666 = vmatpush1.msra.mxu0 0.0
        %1667 = vmatprep.subr.mxu0 0.0
        %1668 = vmatpush1.msra.mxu0 0.0
        %1669 = vmatprep.subr.mxu0 0.0
        %1670 = vmatpush1.msra.mxu0 0.0
        %1671 = vmatprep.subr.mxu0 0.0
        %1672 = vmatpush1.msra.mxu0 0.0
        %1673 = vmatprep.subr.mxu0 0.0
        %1674 = vmatpush1.msra.mxu0 0.0
        %1675 = vmatprep.subr.mxu0 0.0
        %1676 = vmatpush1.msra.mxu0 0.0
        %1677 = vmatprep.subr.mxu0 0.0
        %1678 = vmatpush1.msra.mxu0 0.0
        %1679 = vmatprep.subr.mxu0 0.0
        %1680 = vmatpush1.msra.mxu0 0.0
        %1681 = vmatprep.subr.mxu0 0.0
        %1682 = vmatpush1.msra.mxu0 0.0
        %1683 = vmatprep.subr.mxu0 0.0
        %1684 = vmatpush1.msra.mxu0 0.0
        %1685 = vmatprep.subr.mxu0 0.0
        %1686 = vmatpush1.msra.mxu0 0.0
        %1687 = vmatprep.subr.mxu0 0.0
        %1688 = vmatpush1.msra.mxu0 0.0
        %1689 = vmatprep.subr.mxu0 0.0
        %1690 = vmatpush1.msra.mxu0 0.0
        %1691 = vmatprep.subr.mxu0 0.0
        %1692 = vmatpush1.msra.mxu0 0.0
        %1693 = vmatprep.subr.mxu0 0.0
        %1694 = vmatpush1.msra.mxu0 0.0
        %1695 = vmatprep.subr.mxu0 0.0
        %1696 = vmatpush1.msra.mxu0 0.0
        %1697 = vmatprep.subr.mxu0 0.0
        %1698 = vmatpush1.msra.mxu0 0.0
        %1699 = vmatprep.subr.mxu0 0.0
        %1700 = vmatpush1.msra.mxu0 0.0
        %1701 = vmatprep.subr.mxu0 0.0
        %1702 = vmatpush1.msra.mxu0 0.0
        %1703 = vmatprep.subr.mxu0 0.0
        %1704 = vmatpush1.msra.mxu0 0.0
        %1705 = vmatprep.subr.mxu0 0.0
        %1706 = vmatpush1.msra.mxu0 0.0
        %1707 = vmatprep.subr.mxu0 0.0
        %1708 = vmatpush1.msra.mxu0 0.0
        %1709 = vmatprep.subr.mxu0 0.0
        %1710 = vmatpush1.msra.mxu0 0.0
        %1711 = vmatprep.subr.mxu0 0.0
        %1712 = vmatpush1.msra.mxu0 0.0
        %1713 = vmatprep.subr.mxu0 0.0
        %1714 = vmatpush1.msra.mxu0 0.0
        %1715 = vmatprep.subr.mxu0 0.0
        %1716 = vmatpush1.msra.mxu0 0.0
        %1717 = vmatprep.subr.mxu0 0.0
        %1718 = vmatpush1.msra.mxu0 0.0
        %1719 = vmatprep.mubr.f32.mxu0 0.0
        %1720 = vmatmul.mubr.f32.gmra.mrb[0].mxu0 %v1650
        %v1721 = vpop.f32.mrb[0].mxu0
        %v1722 = vadd.f32 0.0, %v1721
        %v1723 = vpop.f32.mrb[0].mxu0
        %1724 = vmatprep.mubr.f32.mxu0 0.0
        %1725 = vmatmul.mubr.f32.gmra.mrb[0].mxu0 %v1653
        %v1726 = vpop.f32.mrb[0].mxu0
        %v1727 = vadd.f32 0.0, %v1726
        %v1728 = vpop.f32.mrb[0].mxu0
        %1729 = vdwg.mxu0
        %v1731 = vsel %vm1648, %v1644, 0
        %v1734 = vsel %vm1648, %v1645, 0
        %1736 = vmatprep.subr.mxu0 0.0
        %1737 = vmatpush1.msra.mxu0 %v1722
        %1738 = vmatprep.subr.mxu0 0.0
        %1739 = vmatpush1.msra.mxu0 %v1727
        %1740 = vmatprep.subr.mxu0 0.0
        %1741 = vmatpush1.msra.mxu0 0.0
        %1742 = vmatprep.subr.mxu0 0.0
        %1743 = vmatpush1.msra.mxu0 0.0
        %1744 = vmatprep.subr.mxu0 0.0
        %1745 = vmatpush1.msra.mxu0 0.0
        %1746 = vmatprep.subr.mxu0 0.0
        %1747 = vmatpush1.msra.mxu0 0.0
        %1748 = vmatprep.subr.mxu0 0.0
        %1749 = vmatpush1.msra.mxu0 0.0
        %1750 = vmatprep.subr.mxu0 0.0
        %1751 = vmatpush1.msra.mxu0 0.0
        %1752 = vmatprep.subr.mxu0 0.0
        %1753 = vmatpush1.msra.mxu0 0.0
        %1754 = vmatprep.subr.mxu0 0.0
        %1755 = vmatpush1.msra.mxu0 0.0
        %1756 = vmatprep.subr.mxu0 0.0
        %1757 = vmatpush1.msra.mxu0 0.0
        %1758 = vmatprep.subr.mxu0 0.0
        %1759 = vmatpush1.msra.mxu0 0.0
        %1760 = vmatprep.subr.mxu0 0.0
        %1761 = vmatpush1.msra.mxu0 0.0
        %1762 = vmatprep.subr.mxu0 0.0
        %1763 = vmatpush1.msra.mxu0 0.0
        %1764 = vmatprep.subr.mxu0 0.0
        %1765 = vmatpush1.msra.mxu0 0.0
        %1766 = vmatprep.subr.mxu0 0.0
        %1767 = vmatpush1.msra.mxu0 0.0
        %1768 = vmatprep.subr.mxu0 0.0
        %1769 = vmatpush1.msra.mxu0 0.0
        %1770 = vmatprep.subr.mxu0 0.0
        %1771 = vmatpush1.msra.mxu0 0.0
        %1772 = vmatprep.subr.mxu0 0.0
        %1773 = vmatpush1.msra.mxu0 0.0
        %1774 = vmatprep.subr.mxu0 0.0
        %1775 = vmatpush1.msra.mxu0 0.0
        %1776 = vmatprep.subr.mxu0 0.0
        %1777 = vmatpush1.msra.mxu0 0.0
        %1778 = vmatprep.subr.mxu0 0.0
        %1779 = vmatpush1.msra.mxu0 0.0
        %1780 = vmatprep.subr.mxu0 0.0
        %1781 = vmatpush1.msra.mxu0 0.0
        %1782 = vmatprep.subr.mxu0 0.0
        %1783 = vmatpush1.msra.mxu0 0.0
        %1784 = vmatprep.subr.mxu0 0.0
        %1785 = vmatpush1.msra.mxu0 0.0
        %1786 = vmatprep.subr.mxu0 0.0
        %1787 = vmatpush1.msra.mxu0 0.0
        %1788 = vmatprep.subr.mxu0 0.0
        %1789 = vmatpush1.msra.mxu0 0.0
        %1790 = vmatprep.subr.mxu0 0.0
        %1791 = vmatpush1.msra.mxu0 0.0
        %1792 = vmatprep.subr.mxu0 0.0
        %1793 = vmatpush1.msra.mxu0 0.0
        %1794 = vmatprep.subr.mxu0 0.0
        %1795 = vmatpush1.msra.mxu0 0.0
        %1796 = vmatprep.subr.mxu0 0.0
        %1797 = vmatpush1.msra.mxu0 0.0
        %1798 = vmatprep.subr.mxu0 0.0
        %1799 = vmatpush1.msra.mxu0 0.0
        %1800 = vmatprep.mubr.f32.mxu0 0.0
        %1801 = vmatmul.mubr.f32.gmra.mrb[0].mxu0 %v1731
        %v1802 = vpop.f32.mrb[0].mxu0
        %v1803 = vadd.f32 0.0, %v1802
        %v1804 = vpop.f32.mrb[0].mxu0
        %1805 = vmatprep.mubr.f32.mxu0 0.0
        %1806 = vmatmul.mubr.f32.gmra.mrb[0].mxu0 %v1734
        %v1807 = vpop.f32.mrb[0].mxu0
        %v1808 = vadd.f32 0.0, %v1807
        %v1809 = vpop.f32.mrb[0].mxu0
        %1810 = vdwg.mxu0
        %v1811 = vsub.f32 %v1636, %v1803
        %v1812 = vsub.f32 %v1641, %v1808
        %v1813 = vand.u32 2147483647, %v1811
        %v1814 = vand.u32 2147483647, %v1812
        %v1815 = vsel %vm1648, %v1813, 0.0
        %v1816 = vsel %vm1648, %v1814, 0.0
        %v1817 = vadd.f32 %v1815, %v1816
        %v1818 = vrot.slane %v1817, 4
        %v1819 = vadd.f32 %v1817, %v1818
        %v1820 = vrot.slane %v1819, 2
        %v1821 = vadd.f32 %v1819, %v1820
        %v1822 = vrot.slane %v1821, 1
        %v1823 = vadd.f32 %v1821, %v1822
        %vm1824 = vcmask 122880
        %v1825 = vsel %vm1824, %v1823, 0.0
        %1826 = vadd.xlane.f32.xlu0 %v1825
        %v1827 = vpop.xlane.xlu0 %1826
        %v1828 = vrot.slane %v1827, 4
        %v1829 = vadd.f32 %v1827, %v1828
        %v1830 = vrot.slane %v1829, 2
        %v1831 = vadd.f32 %v1829, %v1830
        %v1832 = vrot.slane %v1831, 1
        %v1833 = vadd.f32 %v1831, %v1832
        %s1834 = vtos %v1833
        %v1835 = vld [vmem:[#allocation16] sm:$0xff]
        %v1836 = vld [vmem:[%s12] sm:$0xff]
        %v1837 = vld [vmem:[%s12 + $0x8] sm:$0xff]
        %1838 = vmatprep.subr.mxu0 0.0
        %1839 = vmatpush1.msra.mxu0 %v1836
        %1840 = vmatprep.subr.mxu0 0.0
        %1841 = vmatpush1.msra.mxu0 %v1837
        %1842 = vmatprep.subr.mxu0 0.0
        %1843 = vmatpush1.msra.mxu0 0.0
        %1844 = vmatprep.subr.mxu0 0.0
        %1845 = vmatpush1.msra.mxu0 0.0
        %1846 = vmatprep.subr.mxu0 0.0
        %1847 = vmatpush1.msra.mxu0 0.0
        %1848 = vmatprep.subr.mxu0 0.0
        %1849 = vmatpush1.msra.mxu0 0.0
        %1850 = vmatprep.subr.mxu0 0.0
        %1851 = vmatpush1.msra.mxu0 0.0
        %1852 = vmatprep.subr.mxu0 0.0
        %1853 = vmatpush1.msra.mxu0 0.0
        %1854 = vmatprep.subr.mxu0 0.0
        %1855 = vmatpush1.msra.mxu0 0.0
        %1856 = vmatprep.subr.mxu0 0.0
        %1857 = vmatpush1.msra.mxu0 0.0
        %1858 = vmatprep.subr.mxu0 0.0
        %1859 = vmatpush1.msra.mxu0 0.0
        %1860 = vmatprep.subr.mxu0 0.0
        %1861 = vmatpush1.msra.mxu0 0.0
        %1862 = vmatprep.subr.mxu0 0.0
        %1863 = vmatpush1.msra.mxu0 0.0
        %1864 = vmatprep.subr.mxu0 0.0
        %1865 = vmatpush1.msra.mxu0 0.0
        %1866 = vmatprep.subr.mxu0 0.0
        %1867 = vmatpush1.msra.mxu0 0.0
        %1868 = vmatprep.subr.mxu0 0.0
        %1869 = vmatpush1.msra.mxu0 0.0
        %1870 = vmatprep.subr.mxu0 0.0
        %1871 = vmatpush1.msra.mxu0 0.0
        %1872 = vmatprep.subr.mxu0 0.0
        %1873 = vmatpush1.msra.mxu0 0.0
        %1874 = vmatprep.subr.mxu0 0.0
        %1875 = vmatpush1.msra.mxu0 0.0
        %1876 = vmatprep.subr.mxu0 0.0
        %1877 = vmatpush1.msra.mxu0 0.0
        %1878 = vmatprep.subr.mxu0 0.0
        %1879 = vmatpush1.msra.mxu0 0.0
        %1880 = vmatprep.subr.mxu0 0.0
        %1881 = vmatpush1.msra.mxu0 0.0
        %1882 = vmatprep.subr.mxu0 0.0
        %1883 = vmatpush1.msra.mxu0 0.0
        %1884 = vmatprep.subr.mxu0 0.0
        %1885 = vmatpush1.msra.mxu0 0.0
        %1886 = vmatprep.subr.mxu0 0.0
        %1887 = vmatpush1.msra.mxu0 0.0
        %1888 = vmatprep.subr.mxu0 0.0
        %1889 = vmatpush1.msra.mxu0 0.0
        %1890 = vmatprep.subr.mxu0 0.0
        %1891 = vmatpush1.msra.mxu0 0.0
        %1892 = vmatprep.subr.mxu0 0.0
        %1893 = vmatpush1.msra.mxu0 0.0
        %1894 = vmatprep.subr.mxu0 0.0
        %1895 = vmatpush1.msra.mxu0 0.0
        %1896 = vmatprep.subr.mxu0 0.0
        %1897 = vmatpush1.msra.mxu0 0.0
        %1898 = vmatprep.subr.mxu0 0.0
        %1899 = vmatpush1.msra.mxu0 0.0
        %1900 = vmatprep.subr.mxu0 0.0
        %1901 = vmatpush1.msra.mxu0 0.0
        %1902 = vmatprep.mubr.f32.mxu0 0.0
        %1903 = vmatmul.mubr.f32.gmra.mrb[0].mxu0 %v1650
        %v1904 = vpop.f32.mrb[0].mxu0
        %v1905 = vadd.f32 0.0, %v1904
        %v1906 = vpop.f32.mrb[0].mxu0
        %1907 = vmatprep.mubr.f32.mxu0 0.0
        %1908 = vmatmul.mubr.f32.gmra.mrb[0].mxu0 %v1653
        %v1909 = vpop.f32.mrb[0].mxu0
        %v1910 = vadd.f32 0.0, %v1909
        %v1911 = vpop.f32.mrb[0].mxu0
        %1912 = vdwg.mxu0
        %v1914 = vsel %vm1648, %v1835, 0
        %1916 = vmatprep.subr.mxu0 0.0
        %1917 = vmatpush1.msra.mxu0 %v1905
        %1918 = vmatprep.subr.mxu0 0.0
        %1919 = vmatpush1.msra.mxu0 %v1910
        %1920 = vmatprep.subr.mxu0 0.0
        %1921 = vmatpush1.msra.mxu0 0.0
        %1922 = vmatprep.subr.mxu0 0.0
        %1923 = vmatpush1.msra.mxu0 0.0
        %1924 = vmatprep.subr.mxu0 0.0
        %1925 = vmatpush1.msra.mxu0 0.0
        %1926 = vmatprep.subr.mxu0 0.0
        %1927 = vmatpush1.msra.mxu0 0.0
        %1928 = vmatprep.subr.mxu0 0.0
        %1929 = vmatpush1.msra.mxu0 0.0
        %1930 = vmatprep.subr.mxu0 0.0
        %1931 = vmatpush1.msra.mxu0 0.0
        %1932 = vmatprep.subr.mxu0 0.0
        %1933 = vmatpush1.msra.mxu0 0.0
        %1934 = vmatprep.subr.mxu0 0.0
        %1935 = vmatpush1.msra.mxu0 0.0
        %1936 = vmatprep.subr.mxu0 0.0
        %1937 = vmatpush1.msra.mxu0 0.0
        %1938 = vmatprep.subr.mxu0 0.0
        %1939 = vmatpush1.msra.mxu0 0.0
        %1940 = vmatprep.subr.mxu0 0.0
        %1941 = vmatpush1.msra.mxu0 0.0
        %1942 = vmatprep.subr.mxu0 0.0
        %1943 = vmatpush1.msra.mxu0 0.0
        %1944 = vmatprep.subr.mxu0 0.0
        %1945 = vmatpush1.msra.mxu0 0.0
        %1946 = vmatprep.subr.mxu0 0.0
        %1947 = vmatpush1.msra.mxu0 0.0
        %1948 = vmatprep.subr.mxu0 0.0
        %1949 = vmatpush1.msra.mxu0 0.0
        %1950 = vmatprep.subr.mxu0 0.0
        %1951 = vmatpush1.msra.mxu0 0.0
        %1952 = vmatprep.subr.mxu0 0.0
        %1953 = vmatpush1.msra.mxu0 0.0
        %1954 = vmatprep.subr.mxu0 0.0
        %1955 = vmatpush1.msra.mxu0 0.0
        %1956 = vmatprep.subr.mxu0 0.0
        %1957 = vmatpush1.msra.mxu0 0.0
        %1958 = vmatprep.subr.mxu0 0.0
        %1959 = vmatpush1.msra.mxu0 0.0
        %1960 = vmatprep.subr.mxu0 0.0
        %1961 = vmatpush1.msra.mxu0 0.0
        %1962 = vmatprep.subr.mxu0 0.0
        %1963 = vmatpush1.msra.mxu0 0.0
        %1964 = vmatprep.subr.mxu0 0.0
        %1965 = vmatpush1.msra.mxu0 0.0
        %1966 = vmatprep.subr.mxu0 0.0
        %1967 = vmatpush1.msra.mxu0 0.0
        %1968 = vmatprep.subr.mxu0 0.0
        %1969 = vmatpush1.msra.mxu0 0.0
        %1970 = vmatprep.subr.mxu0 0.0
        %1971 = vmatpush1.msra.mxu0 0.0
        %1972 = vmatprep.subr.mxu0 0.0
        %1973 = vmatpush1.msra.mxu0 0.0
        %1974 = vmatprep.subr.mxu0 0.0
        %1975 = vmatpush1.msra.mxu0 0.0
        %1976 = vmatprep.subr.mxu0 0.0
        %1977 = vmatpush1.msra.mxu0 0.0
        %1978 = vmatprep.subr.mxu0 0.0
        %1979 = vmatpush1.msra.mxu0 0.0
        %1980 = vmatprep.mubr.f32.mxu0 0.0
        %1981 = vmatmul.mubr.f32.gmra.mrb[0].mxu0 %v1914
        %v1982 = vpop.f32.mrb[0].mxu0
        %v1983 = vadd.f32 0.0, %v1982
        %v1984 = vpop.f32.mrb[0].mxu0
        %1985 = vdwg.mxu0
        %v1986 = vand.u32 2147483647, %v1983
        %vm1987 = vcmask 64512
        %v1988 = vsel %vm1987, %v1986, 0.0
        %v1989 = vrot.slane %v1988, 4
        %v1990 = vadd.f32 %v1988, %v1989
        %v1991 = vrot.slane %v1990, 2
        %v1992 = vadd.f32 %v1990, %v1991
        %v1993 = vrot.slane %v1992, 1
        %v1994 = vadd.f32 %v1992, %v1993
        %vm1995 = vcmask 57344
        %v1996 = vsel %vm1995, %v1994, 0.0
        %1997 = vadd.xlane.f32.xlu0 %v1996
        %v1998 = vpop.xlane.xlu0 %1997
        %v1999 = vrot.slane %v1998, 4
        %v2000 = vadd.f32 %v1998, %v1999
        %v2001 = vrot.slane %v2000, 2
        %v2002 = vadd.f32 %v2000, %v2001
        %v2003 = vrot.slane %v2002, 1
        %v2004 = vadd.f32 %v2002, %v2003
        %s2005 = vtos %v2004
        %v2006 = vlaneseq
        %v2007 = vand.u32 %v2006, 127
        %vm2008 = vcmp.eq.s32.totalorder %v2007, 0
        %v2009 = vstv %s704
        %v2010 = vsel %vm2008, %v2009, 0.0
        %vm2011 = vcmp.eq.s32.totalorder %v2007, 1
        %v2012 = vstv %s727
        %v2013 = vsel %vm2011, %v2012, %v2010
        %vm2014 = vcmp.eq.s32.totalorder %v2007, 2
        %v2015 = vstv %s754
        %v2016 = vsel %vm2014, %v2015, %v2013
        %vm2017 = vcmp.eq.s32.totalorder %v2007, 3
        %v2018 = vstv %s777
        %v2019 = vsel %vm2017, %v2018, %v2016
        %vm2020 = vcmp.eq.s32.totalorder %v2007, 4
        %v2021 = vstv %s800
        %v2022 = vsel %vm2020, %v2021, %v2019
        %vm2023 = vcmp.eq.s32.totalorder %v2007, 5
        %v2024 = vstv %s827
        %v2025 = vsel %vm2023, %v2024, %v2022
        %vm2026 = vcmp.eq.s32.totalorder %v2007, 6
        %v2027 = vstv %s850
        %v2028 = vsel %vm2026, %v2027, %v2025
        %vm2029 = vcmp.eq.s32.totalorder %v2007, 7
        %v2030 = vstv %s1013
        %v2031 = vsel %vm2029, %v2030, %v2028
        %vm2032 = vcmp.eq.s32.totalorder %v2007, 8
        %v2033 = vstv %s1250
        %v2034 = vsel %vm2032, %v2033, %v2031
        %vm2035 = vcmp.eq.s32.totalorder %v2007, 9
        %v2036 = vstv %s1471
        %v2037 = vsel %vm2035, %v2036, %v2034
        %vm2038 = vcmp.eq.s32.totalorder %v2007, 10
        %v2039 = vstv %s1834
        %v2040 = vsel %vm2038, %v2039, %v2037
        %vm2041 = vcmp.eq.s32.totalorder %v2007, 11
        %v2042 = vstv %s2005
        %v2043 = vsel %vm2041, %v2042, %v2040
        %2044 = vst [vmem:[%s635] sm:$0xff] %v2043
        %p2045 = scmp.lt.s32.totalorder %s34, 1
        %s2046 = scalar_select %p2045, %s34, 1
        %s2047 = smul.addr %s2046, 8
        %s2048 = scalar_lea.vmem %s13, %s2047
        // Predicated region
        $region113: #{matting_loss.1} parent=71 // pred_check
          %p2049 = pneg %p340
        $region114: #{matting_loss.1} parent=71 // pred_check_branch
          %2051 = sbr.rel (%p2049) target = $region116
        $region115: #{matting_loss.1} parent=71 // pred_region
          _
        $region116: #{matting_loss.1} parent=71 // pred_fallthru
          _
      $region72: #{matting_loss.1} parent=5 // pred_fallthru
        _
      %p2052 = scmp.le.s32.totalorder 2, %s29
      // Predicated region
      $region117: #{matting_loss.1} parent=5 // pred_check
        %p2053 = pneg %p2052
      $region118: #{matting_loss.1} parent=5 // pred_check_branch
        %2055 = sbr.rel (%p2053) target = $region120
      $region119: #{matting_loss.1} parent=5 // pred_region
        %s2056 = ssub.s32 %s29, 2
        // Predicated region
        $region121: #{matting_loss.1} parent=119 // pred_check
          %p2057 = pneg %p346
        $region122: #{matting_loss.1} parent=119 // pred_check_branch
          %2059 = sbr.rel (%p2057) target = $region124
        $region123: #{matting_loss.1} parent=119 // pred_region
          %p2060 = scmp.lt.s32.totalorder %s35, 1
          %s2061 = scalar_select %p2060, %s35, 1
          %s2062 = smul.addr %s2061, 8
          %s2063 = scalar_lea.vmem %s13, %s2062
        $region124: #{matting_loss.1} parent=119 // pred_fallthru
          _
      $region120: #{matting_loss.1} parent=5 // pred_fallthru
        _
    $region6: #{matting_loss.1} parent=1 // loop_footer
      %s33 = sadd.s32 1, %s29
    $region7: #{matting_loss.1} parent=1 // loop_footer_branch
      %28 = sbr.rel target = $region3
    $region8: #{matting_loss.1} parent=1 // loop_exit
      _
    %2064 = vsyncpa [#allocation3], 1
    %s2065 = scalar_lea.sflag [#allocation3], 1
    %2066 = vsyncpa %s2065, 1
    %2067 = vsyncpa [#allocation5], 1
    %s2068 = scalar_lea.sflag [#allocation5], 1
    %2069 = vsyncpa %s2068, 1
    %2070 = vsyncpa [#allocation8], 1
    %2071 = vsyncpa [#allocation11], 1
    %2072 = vsyncpa [#allocation14], 1
    %2073 = vsyncpa [#allocation17], 1

</llo_original>
